<compile_context>
chip_gen: v5e
topology: v5e:2x2
jax: 0.10.0
libtpu: 0.0.40
codegen_flags: <defaults>
</compile_context>

<pallas_src>
import functools

import jax
import jax.numpy as jnp
from jax.experimental import pallas as pl
from jax.experimental.pallas import tpu as pltpu


H_PAD = 128  # fc1 hidden dim (32) zero-padded to a full lane width


def _round_up(x, m):
    return ((x + m - 1) // m) * m


# ----------------------------------------------------------------------------
# Kernel 1: fused conv-GEMM (im2col grouped by the 4 pool taps) + bias
#           + 2x2 max-pool + ReLU
# ----------------------------------------------------------------------------
def _conv_pool_relu_kernel(x4_ref, w_ref, b_ref, o_ref):
    w = w_ref[...]
    y0 = jnp.dot(x4_ref[0], w, preferred_element_type=jnp.float32)
    y1 = jnp.dot(x4_ref[1], w, preferred_element_type=jnp.float32)
    y2 = jnp.dot(x4_ref[2], w, preferred_element_type=jnp.float32)
    y3 = jnp.dot(x4_ref[3], w, preferred_element_type=jnp.float32)
    m = jnp.maximum(jnp.maximum(y0, y1), jnp.maximum(y2, y3))
    o_ref[...] = jnp.maximum(m + b_ref[...], 0.0)


def conv_pool_relu(x4, w, b, *, tm_max=512):
    """x4: (4, Mp, K) pool-tap-grouped im2col, w: (K, C), b: (1, C) -> (Mp, C)."""
    _, Mp, K = x4.shape
    C = w.shape[1]
    tm = min(tm_max, _round_up(Mp, 8))
    Mp_pad = _round_up(Mp, tm)
    if Mp_pad != Mp:
        x4 = jnp.pad(x4, ((0, 0), (0, Mp_pad - Mp), (0, 0)))
    out = pl.pallas_call(
        _conv_pool_relu_kernel,
        out_shape=jax.ShapeDtypeStruct((Mp_pad, C), jnp.float32),
        grid=(Mp_pad // tm,),
        in_specs=[
            pl.BlockSpec((4, tm, K), lambda i: (0, i, 0)),
            pl.BlockSpec((K, C), lambda i: (0, 0)),
            pl.BlockSpec((1, C), lambda i: (0, 0)),
        ],
        out_specs=pl.BlockSpec((tm, C), lambda i: (i, 0)),
        compiler_params=pltpu.CompilerParams(dimension_semantics=("parallel",)),
    )(x4, w, b)
    return out[:Mp] if Mp_pad != Mp else out


# ----------------------------------------------------------------------------
# Kernel 2: fused FC head: fc1 + relu + dropout (host-generated mask) + fc2
#           + log_softmax.  Hidden dim padded to 128 lanes.
# ----------------------------------------------------------------------------
def _fc_head_kernel(x_ref, w1_ref, b1_ref, m_ref, w2_ref, b2_ref, o_ref):
    h = (
        jnp.dot(x_ref[...], w1_ref[...], preferred_element_type=jnp.float32)
        + b1_ref[...]
    )
    h = jnp.maximum(h, 0.0) * m_ref[...]  # dropout: mask is 0 or 1/(1-p)
    logits = (
        jnp.dot(h, w2_ref[...], preferred_element_type=jnp.float32) + b2_ref[...]
    )
    z = logits - jnp.max(logits, axis=-1, keepdims=True)
    o_ref[...] = z - jnp.log(jnp.sum(jnp.exp(z), axis=-1, keepdims=True))


def fc_head(x, w1, b1, mask, w2, b2, *, tn_max=256):
    """x: (N, 500), w1: (500, 128), b1: (1, 128), mask: (N, 128),
    w2: (128, 10), b2: (1, 10) -> (N, 10) log-probabilities."""
    N, K = x.shape
    H = w1.shape[1]
    O = w2.shape[1]
    tn = min(tn_max, _round_up(N, 8))
    N_pad = _round_up(N, tn)
    if N_pad != N:
        x = jnp.pad(x, ((0, N_pad - N), (0, 0)))
        mask = jnp.pad(mask, ((0, N_pad - N), (0, 0)))
    out = pl.pallas_call(
        _fc_head_kernel,
        out_shape=jax.ShapeDtypeStruct((N_pad, O), jnp.float32),
        grid=(N_pad // tn,),
        in_specs=[
            pl.BlockSpec((tn, K), lambda i: (i, 0)),
            pl.BlockSpec((K, H), lambda i: (0, 0)),
            pl.BlockSpec((1, H), lambda i: (0, 0)),
            pl.BlockSpec((tn, H), lambda i: (i, 0)),
            pl.BlockSpec((H, O), lambda i: (0, 0)),
            pl.BlockSpec((1, O), lambda i: (0, 0)),
        ],
        out_specs=pl.BlockSpec((tn, O), lambda i: (i, 0)),
        compiler_params=pltpu.CompilerParams(dimension_semantics=("parallel",)),
    )(x, w1, b1, mask, w2, b2)
    return out[:N] if N_pad != N else out


# ----------------------------------------------------------------------------
# Plain-JAX glue: im2col grouped by pool taps, parameter setup
# ----------------------------------------------------------------------------
# TODO(synk): im2col is still materialized in plain JAX (safe to lower); moving
# tap extraction inside the kernel would remove the remaining HBM inflation.
def im2col(x_nhwc, k):
    """(N, H, W, C) -> (N, Ho, Wo, k*k*C), feature order (ky, kx, c)."""
    N, H, W, C = x_nhwc.shape
    Ho, Wo = H - k + 1, W - k + 1
    taps = [
        x_nhwc[:, ky : ky + Ho, kx : kx + Wo, :]
        for ky in range(k)
        for kx in range(k)
    ]
    p = jnp.stack(taps, axis=3)  # (N, Ho, Wo, k*k, C)
    return p.reshape(N, Ho, Wo, k * k * C)


def im2col_pooled(x_nhwc, k):
    """Group the im2col rows by the 4 taps of the subsequent 2x2 max-pool.

    Returns (4, N*Hp*Wp, k*k*C); row order of axis 1 is (n, pooled_y, pooled_x).
    """
    N, H, W, C = x_nhwc.shape
    Ho, Wo = H - k + 1, W - k + 1
    Hp, Wp = Ho // 2, Wo // 2
    K = k * k * C
    cols = im2col(x_nhwc, k)                       # (N, Ho, Wo, K)
    cols = cols.reshape(N, Hp, 2, Wp, 2, K)
    cols = cols.transpose(2, 4, 0, 1, 3, 5)        # (2, 2, N, Hp, Wp, K)
    return cols.reshape(4, N * Hp * Wp, K)


def init_params(key):
    """Deterministic init matching the torch module's parameter shapes."""

    def uniform(k, shape, fan_in):
        bound = 1.0 / jnp.sqrt(fan_in)
        return jax.random.uniform(k, shape, jnp.float32, -bound, bound)

    ks = jax.random.split(key, 8)
    conv1_w = uniform(ks[0], (10, 1, 5, 5), 1 * 5 * 5)
    conv1_b = uniform(ks[1], (10,), 1 * 5 * 5)
    conv2_w = uniform(ks[2], (20, 10, 3, 3), 10 * 3 * 3)
    conv2_b = uniform(ks[3], (20,), 10 * 3 * 3)
    fc1_w = uniform(ks[4], (32, 500), 500)
    fc1_b = uniform(ks[5], (32,), 500)
    fc2_w = uniform(ks[6], (10, 32), 32)
    fc2_b = uniform(ks[7], (10,), 32)
    return {
        # conv weights in im2col GEMM form: (k*k*Cin, Cout)
        "w1m": conv1_w.transpose(2, 3, 1, 0).reshape(25, 10),
        "b1": conv1_b.reshape(1, 10),
        "w2m": conv2_w.transpose(2, 3, 1, 0).reshape(90, 20),
        "b2": conv2_b.reshape(1, 20),
        # fc weights, hidden dim zero-padded 32 -> 128
        "fw1": jnp.pad(fc1_w.T, ((0, 0), (0, H_PAD - 32))),   # (500, 128)
        "fb1": jnp.pad(fc1_b.reshape(1, 32), ((0, 0), (0, H_PAD - 32))),
        "fw2": jnp.pad(fc2_w.T, ((0, H_PAD - 32), (0, 0))),   # (128, 10)
        "fb2": fc2_b.reshape(1, 10),
    }


@functools.partial(jax.jit, static_argnames=("training",))
def net_forward(x_nchw, params, dropout_key, training=True):
    N = x_nchw.shape[0]
    x = jnp.transpose(x_nchw, (0, 2, 3, 1)).astype(jnp.float32)  # NHWC

    # conv1 (k=5) + 2x2 maxpool + relu fused: 28x28 -> 12x12, 10 channels
    x4 = im2col_pooled(x, 5)                                   # (4, N*144, 25)
    h1 = conv_pool_relu(x4, params["w1m"], params["b1"]).reshape(N, 12, 12, 10)

    # conv2 (k=3) + 2x2 maxpool + relu fused: 12x12 -> 5x5, 20 channels
    x4b = im2col_pooled(h1, 3)                                 # (4, N*25, 90)
    h2 = conv_pool_relu(x4b, params["w2m"], params["b2"]).reshape(N, 5, 5, 20)

    # flatten in torch's NCHW .view(N, -1) ordering: (c, y, x)
    flat = jnp.transpose(h2, (0, 3, 1, 2)).reshape(N, 20 * 5 * 5)

    # dropout mask (p=0.5), pre-scaled by 1/(1-p); identity when not training
    if training:
        keep = jax.random.bernoulli(dropout_key, 0.5, (N, 32))
        scale = keep.astype(jnp.float32) * 2.0
    else:
        scale = jnp.ones((N, 32), jnp.float32)
    mask = jnp.pad(scale, ((0, 0), (0, H_PAD - 32)))           # (N, 128)

    return fc_head(
        flat, params["fw1"], params["fb1"], mask, params["fw2"], params["fb2"]
    )


if __name__ == "__main__":
    key = jax.random.PRNGKey(0)
    k_param, k_data, k_drop = jax.random.split(key, 3)

    params = init_params(k_param)
    # Spatial size must be 28x28 so that 20*5*5 = 500 features reach fc1.
    x = jax.random.normal(k_data, (2, 1, 28, 28), dtype=jnp.float32)

    out = net_forward(x, params, k_drop, training=True)
    out = jax.block_until_ready(out)

    assert out.shape == (2, 10) and out.dtype == jnp.float32
    row_sums = jnp.exp(out).sum(axis=-1)          # log_softmax sanity check
    assert bool(jnp.all(jnp.abs(row_sums - 1.0) < 1e-4))
    print("KERNEL_OK")
</pallas_src>

<mosaic_0001>
module attributes {stable_mosaic.version = 11 : i64} {
  func.func @_conv_pool_relu_kernel(%arg0: i32, %arg1: memref<4x288x25xf32, #tpu.memory_space<vmem>>, %arg2: memref<25x10xf32, #tpu.memory_space<vmem>>, %arg3: memref<1x10xf32, #tpu.memory_space<vmem>>, %arg4: memref<288x10xf32, #tpu.memory_space<vmem>>) attributes {dimension_semantics = [#tpu.dimension_semantics<parallel>], iteration_bounds = array<i64: 1>, scalar_prefetch = 0 : i64, scratch_operands = 0 : i64, tpu.core_type = #tpu.core_type<tc>, window_params = [{transform_indices = @transform_0, window_bounds = array<i64: 4, 288, 25>}, {pipeline_mode = #tpu.pipeline_mode<synchronous>, transform_indices = @transform_1, window_bounds = array<i64: 25, 10>}, {pipeline_mode = #tpu.pipeline_mode<synchronous>, transform_indices = @transform_2, window_bounds = array<i64: 1, 10>}, {transform_indices = @transform_3, window_bounds = array<i64: 288, 10>}]} {
    %c0 = arith.constant 0 : index
    %c0_0 = arith.constant 0 : index
    %0 = vector.load %arg2[%c0, %c0_0] : memref<25x10xf32, #tpu.memory_space<vmem>>, vector<25x10xf32>
    %c0_1 = arith.constant 0 : index
    %c0_2 = arith.constant 0 : index
    %c0_3 = arith.constant 0 : index
    %1 = vector.load %arg1[%c0_1, %c0_2, %c0_3] : memref<4x288x25xf32, #tpu.memory_space<vmem>>, vector<1x288x25xf32>
    %2 = vector.shape_cast %1 : vector<1x288x25xf32> to vector<288x25xf32>
    %cst = arith.constant dense<0.000000e+00> : vector<288x10xf32>
    %3 = tpu.matmul %2, %0, %cst {dimension_numbers = #tpu.dot_dimension_numbers<[1], [0], [0], [1], [0, 0, 1, 1], [], []>} : vector<288x25xf32>, vector<25x10xf32>, vector<288x10xf32> -> vector<288x10xf32>
    %c1 = arith.constant 1 : index
    %c0_4 = arith.constant 0 : index
    %c0_5 = arith.constant 0 : index
    %4 = vector.load %arg1[%c1, %c0_4, %c0_5] : memref<4x288x25xf32, #tpu.memory_space<vmem>>, vector<1x288x25xf32>
    %5 = vector.shape_cast %4 : vector<1x288x25xf32> to vector<288x25xf32>
    %cst_6 = arith.constant dense<0.000000e+00> : vector<288x10xf32>
    %6 = tpu.matmul %5, %0, %cst_6 {dimension_numbers = #tpu.dot_dimension_numbers<[1], [0], [0], [1], [0, 0, 1, 1], [], []>} : vector<288x25xf32>, vector<25x10xf32>, vector<288x10xf32> -> vector<288x10xf32>
    %c2 = arith.constant 2 : index
    %c0_7 = arith.constant 0 : index
    %c0_8 = arith.constant 0 : index
    %7 = vector.load %arg1[%c2, %c0_7, %c0_8] : memref<4x288x25xf32, #tpu.memory_space<vmem>>, vector<1x288x25xf32>
    %8 = vector.shape_cast %7 : vector<1x288x25xf32> to vector<288x25xf32>
    %cst_9 = arith.constant dense<0.000000e+00> : vector<288x10xf32>
    %9 = tpu.matmul %8, %0, %cst_9 {dimension_numbers = #tpu.dot_dimension_numbers<[1], [0], [0], [1], [0, 0, 1, 1], [], []>} : vector<288x25xf32>, vector<25x10xf32>, vector<288x10xf32> -> vector<288x10xf32>
    %c3 = arith.constant 3 : index
    %c0_10 = arith.constant 0 : index
    %c0_11 = arith.constant 0 : index
    %10 = vector.load %arg1[%c3, %c0_10, %c0_11] : memref<4x288x25xf32, #tpu.memory_space<vmem>>, vector<1x288x25xf32>
    %11 = vector.shape_cast %10 : vector<1x288x25xf32> to vector<288x25xf32>
    %cst_12 = arith.constant dense<0.000000e+00> : vector<288x10xf32>
    %12 = tpu.matmul %11, %0, %cst_12 {dimension_numbers = #tpu.dot_dimension_numbers<[1], [0], [0], [1], [0, 0, 1, 1], [], []>} : vector<288x25xf32>, vector<25x10xf32>, vector<288x10xf32> -> vector<288x10xf32>
    %13 = arith.maximumf %3, %6 : vector<288x10xf32>
    %14 = arith.maximumf %9, %12 : vector<288x10xf32>
    %15 = arith.maximumf %13, %14 : vector<288x10xf32>
    %c0_13 = arith.constant 0 : index
    %c0_14 = arith.constant 0 : index
    %16 = vector.load %arg3[%c0_13, %c0_14] : memref<1x10xf32, #tpu.memory_space<vmem>>, vector<1x10xf32>
    %17 = vector.broadcast %16 : vector<1x10xf32> to vector<288x10xf32>
    %18 = arith.addf %15, %17 : vector<288x10xf32>
    %cst_15 = arith.constant 0.000000e+00 : f32
    %19 = vector.broadcast %cst_15 : f32 to vector<288x10xf32>
    %20 = arith.maximumf %18, %19 : vector<288x10xf32>
    %c0_16 = arith.constant 0 : index
    %c0_17 = arith.constant 0 : index
    %21 = vector.load %arg4[%c0_16, %c0_17] : memref<288x10xf32, #tpu.memory_space<vmem>>, vector<288x10xf32>
    tpu.vector_store %arg4[%c0_16, %c0_17], %20 {strides = array<i32>} : memref<288x10xf32, #tpu.memory_space<vmem>>, vector<288x10xf32>,
    return
  }
  func.func @transform_0(%arg0: i32) -> (i32, i32, i32) {
    %c0_i32 = arith.constant 0 : i32
    %c0_i32_0 = arith.constant 0 : i32
    %c0_i32_1 = arith.constant 0 : i32
    return %c0_i32, %arg0, %c0_i32_0 : i32, i32, i32
  }
  func.func @transform_1(%arg0: i32) -> (i32, i32) {
    %c0_i32 = arith.constant 0 : i32
    %c0_i32_0 = arith.constant 0 : i32
    %c0_i32_1 = arith.constant 0 : i32
    return %c0_i32, %c0_i32_0 : i32, i32
  }
  func.func @transform_2(%arg0: i32) -> (i32, i32) {
    %c0_i32 = arith.constant 0 : i32
    %c0_i32_0 = arith.constant 0 : i32
    %c0_i32_1 = arith.constant 0 : i32
    return %c0_i32, %c0_i32_0 : i32, i32
  }
  func.func @transform_3(%arg0: i32) -> (i32, i32) {
    %c0_i32 = arith.constant 0 : i32
    %c0_i32_0 = arith.constant 0 : i32
    return %arg0, %c0_i32 : i32, i32
  }
}

module attributes {stable_mosaic.version = 11 : i64} {
  func.func @_conv_pool_relu_kernel(%arg0: i32, %arg1: memref<4x56x90xf32, #tpu.memory_space<vmem>>, %arg2: memref<90x20xf32, #tpu.memory_space<vmem>>, %arg3: memref<1x20xf32, #tpu.memory_space<vmem>>, %arg4: memref<56x20xf32, #tpu.memory_space<vmem>>) attributes {dimension_semantics = [#tpu.dimension_semantics<parallel>], iteration_bounds = array<i64: 1>, scalar_prefetch = 0 : i64, scratch_operands = 0 : i64, tpu.core_type = #tpu.core_type<tc>, window_params = [{transform_indices = @transform_0, window_bounds = array<i64: 4, 56, 90>}, {pipeline_mode = #tpu.pipeline_mode<synchronous>, transform_indices = @transform_1, window_bounds = array<i64: 90, 20>}, {pipeline_mode = #tpu.pipeline_mode<synchronous>, transform_indices = @transform_2, window_bounds = array<i64: 1, 20>}, {transform_indices = @transform_3, window_bounds = array<i64: 56, 20>}]} {
    %c0 = arith.constant 0 : index
    %c0_0 = arith.constant 0 : index
    %0 = vector.load %arg2[%c0, %c0_0] : memref<90x20xf32, #tpu.memory_space<vmem>>, vector<90x20xf32>
    %c0_1 = arith.constant 0 : index
    %c0_2 = arith.constant 0 : index
    %c0_3 = arith.constant 0 : index
    %1 = vector.load %arg1[%c0_1, %c0_2, %c0_3] : memref<4x56x90xf32, #tpu.memory_space<vmem>>, vector<1x56x90xf32>
    %2 = vector.shape_cast %1 : vector<1x56x90xf32> to vector<56x90xf32>
    %cst = arith.constant dense<0.000000e+00> : vector<56x20xf32>
    %3 = tpu.matmul %2, %0, %cst {dimension_numbers = #tpu.dot_dimension_numbers<[1], [0], [0], [1], [0, 0, 1, 1], [], []>} : vector<56x90xf32>, vector<90x20xf32>, vector<56x20xf32> -> vector<56x20xf32>
    %c1 = arith.constant 1 : index
    %c0_4 = arith.constant 0 : index
    %c0_5 = arith.constant 0 : index
    %4 = vector.load %arg1[%c1, %c0_4, %c0_5] : memref<4x56x90xf32, #tpu.memory_space<vmem>>, vector<1x56x90xf32>
    %5 = vector.shape_cast %4 : vector<1x56x90xf32> to vector<56x90xf32>
    %cst_6 = arith.constant dense<0.000000e+00> : vector<56x20xf32>
    %6 = tpu.matmul %5, %0, %cst_6 {dimension_numbers = #tpu.dot_dimension_numbers<[1], [0], [0], [1], [0, 0, 1, 1], [], []>} : vector<56x90xf32>, vector<90x20xf32>, vector<56x20xf32> -> vector<56x20xf32>
    %c2 = arith.constant 2 : index
    %c0_7 = arith.constant 0 : index
    %c0_8 = arith.constant 0 : index
    %7 = vector.load %arg1[%c2, %c0_7, %c0_8] : memref<4x56x90xf32, #tpu.memory_space<vmem>>, vector<1x56x90xf32>
    %8 = vector.shape_cast %7 : vector<1x56x90xf32> to vector<56x90xf32>
    %cst_9 = arith.constant dense<0.000000e+00> : vector<56x20xf32>
    %9 = tpu.matmul %8, %0, %cst_9 {dimension_numbers = #tpu.dot_dimension_numbers<[1], [0], [0], [1], [0, 0, 1, 1], [], []>} : vector<56x90xf32>, vector<90x20xf32>, vector<56x20xf32> -> vector<56x20xf32>
    %c3 = arith.constant 3 : index
    %c0_10 = arith.constant 0 : index
    %c0_11 = arith.constant 0 : index
    %10 = vector.load %arg1[%c3, %c0_10, %c0_11] : memref<4x56x90xf32, #tpu.memory_space<vmem>>, vector<1x56x90xf32>
    %11 = vector.shape_cast %10 : vector<1x56x90xf32> to vector<56x90xf32>
    %cst_12 = arith.constant dense<0.000000e+00> : vector<56x20xf32>
    %12 = tpu.matmul %11, %0, %cst_12 {dimension_numbers = #tpu.dot_dimension_numbers<[1], [0], [0], [1], [0, 0, 1, 1], [], []>} : vector<56x90xf32>, vector<90x20xf32>, vector<56x20xf32> -> vector<56x20xf32>
    %13 = arith.maximumf %3, %6 : vector<56x20xf32>
    %14 = arith.maximumf %9, %12 : vector<56x20xf32>
    %15 = arith.maximumf %13, %14 : vector<56x20xf32>
    %c0_13 = arith.constant 0 : index
    %c0_14 = arith.constant 0 : index
    %16 = vector.load %arg3[%c0_13, %c0_14] : memref<1x20xf32, #tpu.memory_space<vmem>>, vector<1x20xf32>
    %17 = vector.broadcast %16 : vector<1x20xf32> to vector<56x20xf32>
    %18 = arith.addf %15, %17 : vector<56x20xf32>
    %cst_15 = arith.constant 0.000000e+00 : f32
    %19 = vector.broadcast %cst_15 : f32 to vector<56x20xf32>
    %20 = arith.maximumf %18, %19 : vector<56x20xf32>
    %c0_16 = arith.constant 0 : index
    %c0_17 = arith.constant 0 : index
    %21 = vector.load %arg4[%c0_16, %c0_17] : memref<56x20xf32, #tpu.memory_space<vmem>>, vector<56x20xf32>
    tpu.vector_store %arg4[%c0_16, %c0_17], %20 {strides = array<i32>} : memref<56x20xf32, #tpu.memory_space<vmem>>, vector<56x20xf32>,
    return
  }
  func.func @transform_0(%arg0: i32) -> (i32, i32, i32) {
    %c0_i32 = arith.constant 0 : i32
    %c0_i32_0 = arith.constant 0 : i32
    %c0_i32_1 = arith.constant 0 : i32
    return %c0_i32, %arg0, %c0_i32_0 : i32, i32, i32
  }
  func.func @transform_1(%arg0: i32) -> (i32, i32) {
    %c0_i32 = arith.constant 0 : i32
    %c0_i32_0 = arith.constant 0 : i32
    %c0_i32_1 = arith.constant 0 : i32
    return %c0_i32, %c0_i32_0 : i32, i32
  }
  func.func @transform_2(%arg0: i32) -> (i32, i32) {
    %c0_i32 = arith.constant 0 : i32
    %c0_i32_0 = arith.constant 0 : i32
    %c0_i32_1 = arith.constant 0 : i32
    return %c0_i32, %c0_i32_0 : i32, i32
  }
  func.func @transform_3(%arg0: i32) -> (i32, i32) {
    %c0_i32 = arith.constant 0 : i32
    %c0_i32_0 = arith.constant 0 : i32
    return %arg0, %c0_i32 : i32, i32
  }
}

module attributes {stable_mosaic.version = 11 : i64} {
  func.func @_fc_head_kernel(%arg0: i32, %arg1: memref<8x500xf32, #tpu.memory_space<vmem>>, %arg2: memref<500x128xf32, #tpu.memory_space<vmem>>, %arg3: memref<1x128xf32, #tpu.memory_space<vmem>>, %arg4: memref<8x128xf32, #tpu.memory_space<vmem>>, %arg5: memref<128x10xf32, #tpu.memory_space<vmem>>, %arg6: memref<1x10xf32, #tpu.memory_space<vmem>>, %arg7: memref<8x10xf32, #tpu.memory_space<vmem>>) attributes {dimension_semantics = [#tpu.dimension_semantics<parallel>], iteration_bounds = array<i64: 1>, scalar_prefetch = 0 : i64, scratch_operands = 0 : i64, tpu.core_type = #tpu.core_type<tc>, window_params = [{transform_indices = @transform_0, window_bounds = array<i64: 8, 500>}, {pipeline_mode = #tpu.pipeline_mode<synchronous>, transform_indices = @transform_1, window_bounds = array<i64: 500, 128>}, {pipeline_mode = #tpu.pipeline_mode<synchronous>, transform_indices = @transform_2, window_bounds = array<i64: 1, 128>}, {transform_indices = @transform_3, window_bounds = array<i64: 8, 128>}, {pipeline_mode = #tpu.pipeline_mode<synchronous>, transform_indices = @transform_4, window_bounds = array<i64: 128, 10>}, {pipeline_mode = #tpu.pipeline_mode<synchronous>, transform_indices = @transform_5, window_bounds = array<i64: 1, 10>}, {transform_indices = @transform_6, window_bounds = array<i64: 8, 10>}]} {
    %c0 = arith.constant 0 : index
    %c0_0 = arith.constant 0 : index
    %0 = vector.load %arg1[%c0, %c0_0] : memref<8x500xf32, #tpu.memory_space<vmem>>, vector<8x500xf32>
    %c0_1 = arith.constant 0 : index
    %c0_2 = arith.constant 0 : index
    %1 = vector.load %arg2[%c0_1, %c0_2] : memref<500x128xf32, #tpu.memory_space<vmem>>, vector<500x128xf32>
    %cst = arith.constant dense<0.000000e+00> : vector<8x128xf32>
    %2 = tpu.matmul %0, %1, %cst {dimension_numbers = #tpu.dot_dimension_numbers<[1], [0], [0], [1], [0, 0, 1, 1], [], []>} : vector<8x500xf32>, vector<500x128xf32>, vector<8x128xf32> -> vector<8x128xf32>
    %c0_3 = arith.constant 0 : index
    %c0_4 = arith.constant 0 : index
    %3 = vector.load %arg3[%c0_3, %c0_4] : memref<1x128xf32, #tpu.memory_space<vmem>>, vector<1x128xf32>
    %4 = vector.broadcast %3 : vector<1x128xf32> to vector<8x128xf32>
    %5 = arith.addf %2, %4 : vector<8x128xf32>
    %cst_5 = arith.constant 0.000000e+00 : f32
    %6 = vector.broadcast %cst_5 : f32 to vector<8x128xf32>
    %7 = arith.maximumf %5, %6 : vector<8x128xf32>
    %c0_6 = arith.constant 0 : index
    %c0_7 = arith.constant 0 : index
    %8 = vector.load %arg4[%c0_6, %c0_7] : memref<8x128xf32, #tpu.memory_space<vmem>>, vector<8x128xf32>
    %9 = arith.mulf %7, %8 : vector<8x128xf32>
    %c0_8 = arith.constant 0 : index
    %c0_9 = arith.constant 0 : index
    %10 = vector.load %arg5[%c0_8, %c0_9] : memref<128x10xf32, #tpu.memory_space<vmem>>, vector<128x10xf32>
    %cst_10 = arith.constant dense<0.000000e+00> : vector<8x10xf32>
    %11 = tpu.matmul %9, %10, %cst_10 {dimension_numbers = #tpu.dot_dimension_numbers<[1], [0], [0], [1], [0, 0, 1, 1], [], []>} : vector<8x128xf32>, vector<128x10xf32>, vector<8x10xf32> -> vector<8x10xf32>
    %c0_11 = arith.constant 0 : index
    %c0_12 = arith.constant 0 : index
    %12 = vector.load %arg6[%c0_11, %c0_12] : memref<1x10xf32, #tpu.memory_space<vmem>>, vector<1x10xf32>
    %13 = vector.broadcast %12 : vector<1x10xf32> to vector<8x10xf32>
    %14 = arith.addf %11, %13 : vector<8x10xf32>
    %cst_13 = arith.constant dense<0xFF800000> : vector<8xf32>
    %15 = vector.multi_reduction <maximumf>, %14, %cst_13 [1] : vector<8x10xf32> to vector<8xf32>
    %16 = vector.shape_cast %15 : vector<8xf32> to vector<8x1xf32>
    %17 = vector.broadcast %16 : vector<8x1xf32> to vector<8x10xf32>
    %18 = arith.subf %14, %17 : vector<8x10xf32>
    %19 = math.exp %18 : vector<8x10xf32>
    %cst_14 = arith.constant dense<0.000000e+00> : vector<8xf32>
    %20 = vector.multi_reduction <add>, %19, %cst_14 [1] : vector<8x10xf32> to vector<8xf32>
    %21 = vector.shape_cast %20 : vector<8xf32> to vector<8x1xf32>
    %22 = math.log %21 : vector<8x1xf32>
    %23 = vector.broadcast %22 : vector<8x1xf32> to vector<8x10xf32>
    %24 = arith.subf %18, %23 : vector<8x10xf32>
    %c0_15 = arith.constant 0 : index
    %c0_16 = arith.constant 0 : index
    %25 = vector.load %arg7[%c0_15, %c0_16] : memref<8x10xf32, #tpu.memory_space<vmem>>, vector<8x10xf32>
    tpu.vector_store %arg7[%c0_15, %c0_16], %24 {strides = array<i32>} : memref<8x10xf32, #tpu.memory_space<vmem>>, vector<8x10xf32>,
    return
  }
  func.func @transform_0(%arg0: i32) -> (i32, i32) {
    %c0_i32 = arith.constant 0 : i32
    %c0_i32_0 = arith.constant 0 : i32
    return %arg0, %c0_i32 : i32, i32
  }
  func.func @transform_1(%arg0: i32) -> (i32, i32) {
    %c0_i32 = arith.constant 0 : i32
    %c0_i32_0 = arith.constant 0 : i32
    %c0_i32_1 = arith.constant 0 : i32
    return %c0_i32, %c0_i32_0 : i32, i32
  }
  func.func @transform_2(%arg0: i32) -> (i32, i32) {
    %c0_i32 = arith.constant 0 : i32
    %c0_i32_0 = arith.constant 0 : i32
    %c0_i32_1 = arith.constant 0 : i32
    return %c0_i32, %c0_i32_0 : i32, i32
  }
  func.func @transform_3(%arg0: i32) -> (i32, i32) {
    %c0_i32 = arith.constant 0 : i32
    %c0_i32_0 = arith.constant 0 : i32
    return %arg0, %c0_i32 : i32, i32
  }
  func.func @transform_4(%arg0: i32) -> (i32, i32) {
    %c0_i32 = arith.constant 0 : i32
    %c0_i32_0 = arith.constant 0 : i32
    %c0_i32_1 = arith.constant 0 : i32
    return %c0_i32, %c0_i32_0 : i32, i32
  }
  func.func @transform_5(%arg0: i32) -> (i32, i32) {
    %c0_i32 = arith.constant 0 : i32
    %c0_i32_0 = arith.constant 0 : i32
    %c0_i32_1 = arith.constant 0 : i32
    return %c0_i32, %c0_i32_0 : i32, i32
  }
  func.func @transform_6(%arg0: i32) -> (i32, i32) {
    %c0_i32 = arith.constant 0 : i32
    %c0_i32_0 = arith.constant 0 : i32
    return %arg0, %c0_i32 : i32, i32
  }
}

</mosaic_0001>

<llo_original>
// kernel: net_forward.3
$region0: #{net_forward.3}
  #allocation0 [shape = 'u32[]', space=smem, size = 0x4, offset = 0x4, fixed_abs, tag = 'smem constant byte address 0x4 - core index']
  #allocation1 [shape = 'u32[72,128]{1,0:T(1,128)}', space=vmem, size = 0x9000, scoped, tag = 'internal scratch']
  %s0 = inlined_call_operand.vmem [shape: f32[4,288,25], index: 0, kind: input, shape index: {}]
  %s1 = inlined_call_operand.vmem [shape: f32[25,10], index: 1, kind: input, shape index: {}]
  %s2 = inlined_call_operand.vmem [shape: f32[1,10], index: 2, kind: input, shape index: {}]
  %s3 = inlined_call_operand.vmem [shape: f32[288,10], index: 3, kind: output, shape index: {}]
  %s4 = sld [smem:[#allocation0]]
  $region22: #{net_forward.3} parent=0
    _
  %s6 = ssub.s32 1, %s4
  %s7 = scalar_select 0, %s6, %s4
  // Predicated region
  $region2: #{net_forward.3} parent=0 // pred_check
    _
  $region3: #{net_forward.3} parent=0 // pred_check_branch
    %9 = sbr.rel (0) target = $region5
  $region4: #{net_forward.3} parent=0 // pred_region
    _
  $region5: #{net_forward.3} parent=0 // pred_fallthru
    _
  // Predicated region
  $region6: #{net_forward.3} parent=0 // pred_check
    _
  $region7: #{net_forward.3} parent=0 // pred_check_branch
    %11 = sbr.rel (0) target = $region9
  $region8: #{net_forward.3} parent=0 // pred_region
    _
  $region9: #{net_forward.3} parent=0 // pred_fallthru
    _
  // Predicated region
  $region10: #{net_forward.3} parent=0 // pred_check
    _
  $region11: #{net_forward.3} parent=0 // pred_check_branch
    %13 = sbr.rel (0) target = $region13
  $region12: #{net_forward.3} parent=0 // pred_region
    _
  $region13: #{net_forward.3} parent=0 // pred_fallthru
    _
  %v14 = vld [vmem:[%s1] sm:$0xff]
  %v15 = vld [vmem:[%s1 + $0x8] sm:$0xff]
  %v16 = vld [vmem:[%s1 + $0x10] sm:$0xff]
  %v17 = vld [vmem:[%s1 + $0x18] sm:$0x1]
  %v18 = vld [vmem:[%s0] sm:$0xff]
  %v19 = vld [vmem:[%s0 + $0x8] sm:$0xff]
  %v20 = vld [vmem:[%s0 + $0x10] sm:$0xff]
  %v21 = vld [vmem:[%s0 + $0x18] sm:$0xff]
  %v22 = vld [vmem:[%s0 + $0x20] sm:$0xff]
  %v23 = vld [vmem:[%s0 + $0x28] sm:$0xff]
  %v24 = vld [vmem:[%s0 + $0x30] sm:$0xff]
  %v25 = vld [vmem:[%s0 + $0x38] sm:$0xff]
  %v26 = vld [vmem:[%s0 + $0x40] sm:$0xff]
  %v27 = vld [vmem:[%s0 + $0x48] sm:$0xff]
  %v28 = vld [vmem:[%s0 + $0x50] sm:$0xff]
  %v29 = vld [vmem:[%s0 + $0x58] sm:$0xff]
  %v30 = vld [vmem:[%s0 + $0x60] sm:$0xff]
  %v31 = vld [vmem:[%s0 + $0x68] sm:$0xff]
  %v32 = vld [vmem:[%s0 + $0x70] sm:$0xff]
  %v33 = vld [vmem:[%s0 + $0x78] sm:$0xff]
  %v34 = vld [vmem:[%s0 + $0x80] sm:$0xff]
  %v35 = vld [vmem:[%s0 + $0x88] sm:$0xff]
  %v36 = vld [vmem:[%s0 + $0x90] sm:$0xff]
  %v37 = vld [vmem:[%s0 + $0x98] sm:$0xff]
  %v38 = vld [vmem:[%s0 + $0xa0] sm:$0xff]
  %v39 = vld [vmem:[%s0 + $0xa8] sm:$0xff]
  %v40 = vld [vmem:[%s0 + $0xb0] sm:$0xff]
  %v41 = vld [vmem:[%s0 + $0xb8] sm:$0xff]
  %v42 = vld [vmem:[%s0 + $0xc0] sm:$0xff]
  %v43 = vld [vmem:[%s0 + $0xc8] sm:$0xff]
  %v44 = vld [vmem:[%s0 + $0xd0] sm:$0xff]
  %v45 = vld [vmem:[%s0 + $0xd8] sm:$0xff]
  %v46 = vld [vmem:[%s0 + $0xe0] sm:$0xff]
  %v47 = vld [vmem:[%s0 + $0xe8] sm:$0xff]
  %v48 = vld [vmem:[%s0 + $0xf0] sm:$0xff]
  %v49 = vld [vmem:[%s0 + $0xf8] sm:$0xff]
  %v50 = vld [vmem:[%s0 + $0x100] sm:$0xff]
  %v51 = vld [vmem:[%s0 + $0x108] sm:$0xff]
  %v52 = vld [vmem:[%s0 + $0x110] sm:$0xff]
  %v53 = vld [vmem:[%s0 + $0x118] sm:$0xff]
  %vm54 = vcmask 203776
  %v56 = vsel %vm54, %v18, 0
  %v59 = vsel %vm54, %v19, 0
  %v62 = vsel %vm54, %v20, 0
  %v65 = vsel %vm54, %v21, 0
  %v68 = vsel %vm54, %v22, 0
  %v71 = vsel %vm54, %v23, 0
  %v74 = vsel %vm54, %v24, 0
  %v77 = vsel %vm54, %v25, 0
  %v80 = vsel %vm54, %v26, 0
  %v83 = vsel %vm54, %v27, 0
  %v86 = vsel %vm54, %v28, 0
  %v89 = vsel %vm54, %v29, 0
  %v92 = vsel %vm54, %v30, 0
  %v95 = vsel %vm54, %v31, 0
  %v98 = vsel %vm54, %v32, 0
  %v101 = vsel %vm54, %v33, 0
  %v104 = vsel %vm54, %v34, 0
  %v107 = vsel %vm54, %v35, 0
  %v110 = vsel %vm54, %v36, 0
  %v113 = vsel %vm54, %v37, 0
  %v116 = vsel %vm54, %v38, 0
  %v119 = vsel %vm54, %v39, 0
  %v122 = vsel %vm54, %v40, 0
  %v125 = vsel %vm54, %v41, 0
  %v128 = vsel %vm54, %v42, 0
  %v131 = vsel %vm54, %v43, 0
  %v134 = vsel %vm54, %v44, 0
  %v137 = vsel %vm54, %v45, 0
  %v140 = vsel %vm54, %v46, 0
  %v143 = vsel %vm54, %v47, 0
  %v146 = vsel %vm54, %v48, 0
  %v149 = vsel %vm54, %v49, 0
  %v152 = vsel %vm54, %v50, 0
  %v155 = vsel %vm54, %v51, 0
  %v158 = vsel %vm54, %v52, 0
  %v161 = vsel %vm54, %v53, 0
  %vm163 = vcmask 1040384
  %v165 = vsel %vm163, %v17, 0
  %167 = vmatpush.msra.mxu0 0.0
  %168 = vmatpush.msra.mxu0 0.0
  %169 = vmatpush.msra.mxu0 0.0
  %170 = vmatpush.msra.mxu0 0.0
  %171 = vmatpush.msra.mxu0 0.0
  %172 = vmatpush.msra.mxu0 0.0
  %173 = vmatpush.msra.mxu0 0.0
  %174 = vmatpush.msra.mxu0 0.0
  %175 = vmatpush.msra.mxu0 0.0
  %176 = vmatpush.msra.mxu0 0.0
  %177 = vmatpush.msra.mxu0 0.0
  %178 = vmatpush.msra.mxu0 0.0
  %179 = vmatpush.msra.mxu0 %v165
  %180 = vmatpush.msra.mxu0 %v16
  %181 = vmatpush.msra.mxu0 %v15
  %182 = vmatpush.msra.mxu0 %v14
  %183 = vmatmul.f32.gmra.mxu0 %v56
  %v184 = vpop.f32.mrf.mxu0
  %v185 = vadd.f32 0.0, %v184
  %186 = vmatmul.f32.gmra.mxu0 %v59
  %v187 = vpop.f32.mrf.mxu0
  %v188 = vadd.f32 0.0, %v187
  %189 = vmatmul.f32.gmra.mxu0 %v62
  %v190 = vpop.f32.mrf.mxu0
  %v191 = vadd.f32 0.0, %v190
  %192 = vmatmul.f32.gmra.mxu0 %v65
  %v193 = vpop.f32.mrf.mxu0
  %v194 = vadd.f32 0.0, %v193
  %195 = vmatmul.f32.gmra.mxu0 %v68
  %v196 = vpop.f32.mrf.mxu0
  %v197 = vadd.f32 0.0, %v196
  %198 = vmatmul.f32.gmra.mxu0 %v71
  %v199 = vpop.f32.mrf.mxu0
  %v200 = vadd.f32 0.0, %v199
  %201 = vmatmul.f32.gmra.mxu0 %v74
  %v202 = vpop.f32.mrf.mxu0
  %v203 = vadd.f32 0.0, %v202
  %204 = vmatmul.f32.gmra.mxu0 %v77
  %v205 = vpop.f32.mrf.mxu0
  %v206 = vadd.f32 0.0, %v205
  %207 = vmatmul.f32.gmra.mxu0 %v80
  %v208 = vpop.f32.mrf.mxu0
  %v209 = vadd.f32 0.0, %v208
  %210 = vmatmul.f32.gmra.mxu0 %v83
  %v211 = vpop.f32.mrf.mxu0
  %v212 = vadd.f32 0.0, %v211
  %213 = vmatmul.f32.gmra.mxu0 %v86
  %v214 = vpop.f32.mrf.mxu0
  %v215 = vadd.f32 0.0, %v214
  %216 = vmatmul.f32.gmra.mxu0 %v89
  %v217 = vpop.f32.mrf.mxu0
  %v218 = vadd.f32 0.0, %v217
  %219 = vmatmul.f32.gmra.mxu0 %v92
  %v220 = vpop.f32.mrf.mxu0
  %v221 = vadd.f32 0.0, %v220
  %222 = vmatmul.f32.gmra.mxu0 %v95
  %v223 = vpop.f32.mrf.mxu0
  %v224 = vadd.f32 0.0, %v223
  %225 = vmatmul.f32.gmra.mxu0 %v98
  %v226 = vpop.f32.mrf.mxu0
  %v227 = vadd.f32 0.0, %v226
  %228 = vmatmul.f32.gmra.mxu0 %v101
  %v229 = vpop.f32.mrf.mxu0
  %v230 = vadd.f32 0.0, %v229
  %231 = vmatmul.f32.gmra.mxu0 %v104
  %v232 = vpop.f32.mrf.mxu0
  %v233 = vadd.f32 0.0, %v232
  %234 = vmatmul.f32.gmra.mxu0 %v107
  %v235 = vpop.f32.mrf.mxu0
  %v236 = vadd.f32 0.0, %v235
  %237 = vmatmul.f32.gmra.mxu0 %v110
  %v238 = vpop.f32.mrf.mxu0
  %v239 = vadd.f32 0.0, %v238
  %240 = vmatmul.f32.gmra.mxu0 %v113
  %v241 = vpop.f32.mrf.mxu0
  %v242 = vadd.f32 0.0, %v241
  %243 = vmatmul.f32.gmra.mxu0 %v116
  %v244 = vpop.f32.mrf.mxu0
  %v245 = vadd.f32 0.0, %v244
  %246 = vmatmul.f32.gmra.mxu0 %v119
  %v247 = vpop.f32.mrf.mxu0
  %v248 = vadd.f32 0.0, %v247
  %249 = vmatmul.f32.gmra.mxu0 %v122
  %v250 = vpop.f32.mrf.mxu0
  %v251 = vadd.f32 0.0, %v250
  %252 = vmatmul.f32.gmra.mxu0 %v125
  %v253 = vpop.f32.mrf.mxu0
  %v254 = vadd.f32 0.0, %v253
  %255 = vmatmul.f32.gmra.mxu0 %v128
  %v256 = vpop.f32.mrf.mxu0
  %v257 = vadd.f32 0.0, %v256
  %258 = vmatmul.f32.gmra.mxu0 %v131
  %v259 = vpop.f32.mrf.mxu0
  %v260 = vadd.f32 0.0, %v259
  %261 = vmatmul.f32.gmra.mxu0 %v134
  %v262 = vpop.f32.mrf.mxu0
  %v263 = vadd.f32 0.0, %v262
  %264 = vmatmul.f32.gmra.mxu0 %v137
  %v265 = vpop.f32.mrf.mxu0
  %v266 = vadd.f32 0.0, %v265
  %267 = vmatmul.f32.gmra.mxu0 %v140
  %v268 = vpop.f32.mrf.mxu0
  %v269 = vadd.f32 0.0, %v268
  %270 = vmatmul.f32.gmra.mxu0 %v143
  %v271 = vpop.f32.mrf.mxu0
  %v272 = vadd.f32 0.0, %v271
  %273 = vmatmul.f32.gmra.mxu0 %v146
  %v274 = vpop.f32.mrf.mxu0
  %v275 = vadd.f32 0.0, %v274
  %276 = vmatmul.f32.gmra.mxu0 %v149
  %v277 = vpop.f32.mrf.mxu0
  %v278 = vadd.f32 0.0, %v277
  %279 = vmatmul.f32.gmra.mxu0 %v152
  %v280 = vpop.f32.mrf.mxu0
  %v281 = vadd.f32 0.0, %v280
  %282 = vmatmul.f32.gmra.mxu0 %v155
  %v283 = vpop.f32.mrf.mxu0
  %v284 = vadd.f32 0.0, %v283
  %285 = vmatmul.f32.gmra.mxu0 %v158
  %v286 = vpop.f32.mrf.mxu0
  %v287 = vadd.f32 0.0, %v286
  %288 = vmatmul.f32.gmra.mxu0 %v161
  %v289 = vpop.f32.mrf.mxu0
  %v290 = vadd.f32 0.0, %v289
  %291 = vdwg.mxu0
  %s292 = scalar_lea.vmem %s0, 288
  %v293 = vld [vmem:[%s292] sm:$0xff]
  %v294 = vld [vmem:[%s292 + $0x8] sm:$0xff]
  %v295 = vld [vmem:[%s292 + $0x10] sm:$0xff]
  %v296 = vld [vmem:[%s292 + $0x18] sm:$0xff]
  %v297 = vld [vmem:[%s292 + $0x20] sm:$0xff]
  %v298 = vld [vmem:[%s292 + $0x28] sm:$0xff]
  %v299 = vld [vmem:[%s292 + $0x30] sm:$0xff]
  %v300 = vld [vmem:[%s292 + $0x38] sm:$0xff]
  %v301 = vld [vmem:[%s292 + $0x40] sm:$0xff]
  %v302 = vld [vmem:[%s292 + $0x48] sm:$0xff]
  %v303 = vld [vmem:[%s292 + $0x50] sm:$0xff]
  %v304 = vld [vmem:[%s292 + $0x58] sm:$0xff]
  %v305 = vld [vmem:[%s292 + $0x60] sm:$0xff]
  %v306 = vld [vmem:[%s292 + $0x68] sm:$0xff]
  %v307 = vld [vmem:[%s292 + $0x70] sm:$0xff]
  %v308 = vld [vmem:[%s292 + $0x78] sm:$0xff]
  %v309 = vld [vmem:[%s292 + $0x80] sm:$0xff]
  %v310 = vld [vmem:[%s292 + $0x88] sm:$0xff]
  %v311 = vld [vmem:[%s292 + $0x90] sm:$0xff]
  %v312 = vld [vmem:[%s292 + $0x98] sm:$0xff]
  %v313 = vld [vmem:[%s292 + $0xa0] sm:$0xff]
  %v314 = vld [vmem:[%s292 + $0xa8] sm:$0xff]
  %v315 = vld [vmem:[%s292 + $0xb0] sm:$0xff]
  %v316 = vld [vmem:[%s292 + $0xb8] sm:$0xff]
  %v317 = vld [vmem:[%s292 + $0xc0] sm:$0xff]
  %v318 = vld [vmem:[%s292 + $0xc8] sm:$0xff]
  %v319 = vld [vmem:[%s292 + $0xd0] sm:$0xff]
  %v320 = vld [vmem:[%s292 + $0xd8] sm:$0xff]
  %v321 = vld [vmem:[%s292 + $0xe0] sm:$0xff]
  %v322 = vld [vmem:[%s292 + $0xe8] sm:$0xff]
  %v323 = vld [vmem:[%s292 + $0xf0] sm:$0xff]
  %v324 = vld [vmem:[%s292 + $0xf8] sm:$0xff]
  %v325 = vld [vmem:[%s292 + $0x100] sm:$0xff]
  %v326 = vld [vmem:[%s292 + $0x108] sm:$0xff]
  %v327 = vld [vmem:[%s292 + $0x110] sm:$0xff]
  %v328 = vld [vmem:[%s292 + $0x118] sm:$0xff]
  %v330 = vsel %vm54, %v293, 0
  %v333 = vsel %vm54, %v294, 0
  %v336 = vsel %vm54, %v295, 0
  %v339 = vsel %vm54, %v296, 0
  %v342 = vsel %vm54, %v297, 0
  %v345 = vsel %vm54, %v298, 0
  %v348 = vsel %vm54, %v299, 0
  %v351 = vsel %vm54, %v300, 0
  %v354 = vsel %vm54, %v301, 0
  %v357 = vsel %vm54, %v302, 0
  %v360 = vsel %vm54, %v303, 0
  %v363 = vsel %vm54, %v304, 0
  %v366 = vsel %vm54, %v305, 0
  %v369 = vsel %vm54, %v306, 0
  %v372 = vsel %vm54, %v307, 0
  %v375 = vsel %vm54, %v308, 0
  %v378 = vsel %vm54, %v309, 0
  %v381 = vsel %vm54, %v310, 0
  %v384 = vsel %vm54, %v311, 0
  %v387 = vsel %vm54, %v312, 0
  %v390 = vsel %vm54, %v313, 0
  %v393 = vsel %vm54, %v314, 0
  %v396 = vsel %vm54, %v315, 0
  %v399 = vsel %vm54, %v316, 0
  %v402 = vsel %vm54, %v317, 0
  %v405 = vsel %vm54, %v318, 0
  %v408 = vsel %vm54, %v319, 0
  %v411 = vsel %vm54, %v320, 0
  %v414 = vsel %vm54, %v321, 0
  %v417 = vsel %vm54, %v322, 0
  %v420 = vsel %vm54, %v323, 0
  %v423 = vsel %vm54, %v324, 0
  %v426 = vsel %vm54, %v325, 0
  %v429 = vsel %vm54, %v326, 0
  %v432 = vsel %vm54, %v327, 0
  %v435 = vsel %vm54, %v328, 0
  %437 = vmatpush.msra.mxu0 0.0
  %438 = vmatpush.msra.mxu0 0.0
  %439 = vmatpush.msra.mxu0 0.0
  %440 = vmatpush.msra.mxu0 0.0
  %441 = vmatpush.msra.mxu0 0.0
  %442 = vmatpush.msra.mxu0 0.0
  %443 = vmatpush.msra.mxu0 0.0
  %444 = vmatpush.msra.mxu0 0.0
  %445 = vmatpush.msra.mxu0 0.0
  %446 = vmatpush.msra.mxu0 0.0
  %447 = vmatpush.msra.mxu0 0.0
  %448 = vmatpush.msra.mxu0 0.0
  %449 = vmatpush.msra.mxu0 %v165
  %450 = vmatpush.msra.mxu0 %v16
  %451 = vmatpush.msra.mxu0 %v15
  %452 = vmatpush.msra.mxu0 %v14
  %453 = vmatmul.f32.gmra.mxu0 %v330
  %v454 = vpop.f32.mrf.mxu0
  %v455 = vadd.f32 0.0, %v454
  %456 = vmatmul.f32.gmra.mxu0 %v333
  %v457 = vpop.f32.mrf.mxu0
  %v458 = vadd.f32 0.0, %v457
  %459 = vmatmul.f32.gmra.mxu0 %v336
  %v460 = vpop.f32.mrf.mxu0
  %v461 = vadd.f32 0.0, %v460
  %462 = vmatmul.f32.gmra.mxu0 %v339
  %v463 = vpop.f32.mrf.mxu0
  %v464 = vadd.f32 0.0, %v463
  %465 = vmatmul.f32.gmra.mxu0 %v342
  %v466 = vpop.f32.mrf.mxu0
  %v467 = vadd.f32 0.0, %v466
  %468 = vmatmul.f32.gmra.mxu0 %v345
  %v469 = vpop.f32.mrf.mxu0
  %v470 = vadd.f32 0.0, %v469
  %471 = vmatmul.f32.gmra.mxu0 %v348
  %v472 = vpop.f32.mrf.mxu0
  %v473 = vadd.f32 0.0, %v472
  %474 = vmatmul.f32.gmra.mxu0 %v351
  %v475 = vpop.f32.mrf.mxu0
  %v476 = vadd.f32 0.0, %v475
  %477 = vmatmul.f32.gmra.mxu0 %v354
  %v478 = vpop.f32.mrf.mxu0
  %v479 = vadd.f32 0.0, %v478
  %480 = vmatmul.f32.gmra.mxu0 %v357
  %v481 = vpop.f32.mrf.mxu0
  %v482 = vadd.f32 0.0, %v481
  %483 = vmatmul.f32.gmra.mxu0 %v360
  %v484 = vpop.f32.mrf.mxu0
  %v485 = vadd.f32 0.0, %v484
  %486 = vmatmul.f32.gmra.mxu0 %v363
  %v487 = vpop.f32.mrf.mxu0
  %v488 = vadd.f32 0.0, %v487
  %489 = vmatmul.f32.gmra.mxu0 %v366
  %v490 = vpop.f32.mrf.mxu0
  %v491 = vadd.f32 0.0, %v490
  %492 = vmatmul.f32.gmra.mxu0 %v369
  %v493 = vpop.f32.mrf.mxu0
  %v494 = vadd.f32 0.0, %v493
  %495 = vmatmul.f32.gmra.mxu0 %v372
  %v496 = vpop.f32.mrf.mxu0
  %v497 = vadd.f32 0.0, %v496
  %498 = vmatmul.f32.gmra.mxu0 %v375
  %v499 = vpop.f32.mrf.mxu0
  %v500 = vadd.f32 0.0, %v499
  %501 = vmatmul.f32.gmra.mxu0 %v378
  %v502 = vpop.f32.mrf.mxu0
  %v503 = vadd.f32 0.0, %v502
  %504 = vmatmul.f32.gmra.mxu0 %v381
  %v505 = vpop.f32.mrf.mxu0
  %v506 = vadd.f32 0.0, %v505
  %507 = vmatmul.f32.gmra.mxu0 %v384
  %v508 = vpop.f32.mrf.mxu0
  %v509 = vadd.f32 0.0, %v508
  %510 = vmatmul.f32.gmra.mxu0 %v387
  %v511 = vpop.f32.mrf.mxu0
  %v512 = vadd.f32 0.0, %v511
  %513 = vmatmul.f32.gmra.mxu0 %v390
  %v514 = vpop.f32.mrf.mxu0
  %v515 = vadd.f32 0.0, %v514
  %516 = vmatmul.f32.gmra.mxu0 %v393
  %v517 = vpop.f32.mrf.mxu0
  %v518 = vadd.f32 0.0, %v517
  %519 = vmatmul.f32.gmra.mxu0 %v396
  %v520 = vpop.f32.mrf.mxu0
  %v521 = vadd.f32 0.0, %v520
  %522 = vmatmul.f32.gmra.mxu0 %v399
  %v523 = vpop.f32.mrf.mxu0
  %v524 = vadd.f32 0.0, %v523
  %525 = vmatmul.f32.gmra.mxu0 %v402
  %v526 = vpop.f32.mrf.mxu0
  %v527 = vadd.f32 0.0, %v526
  %528 = vmatmul.f32.gmra.mxu0 %v405
  %v529 = vpop.f32.mrf.mxu0
  %v530 = vadd.f32 0.0, %v529
  %531 = vmatmul.f32.gmra.mxu0 %v408
  %v532 = vpop.f32.mrf.mxu0
  %v533 = vadd.f32 0.0, %v532
  %534 = vmatmul.f32.gmra.mxu0 %v411
  %v535 = vpop.f32.mrf.mxu0
  %v536 = vadd.f32 0.0, %v535
  %537 = vmatmul.f32.gmra.mxu0 %v414
  %v538 = vpop.f32.mrf.mxu0
  %v539 = vadd.f32 0.0, %v538
  %540 = vmatmul.f32.gmra.mxu0 %v417
  %v541 = vpop.f32.mrf.mxu0
  %v542 = vadd.f32 0.0, %v541
  %543 = vmatmul.f32.gmra.mxu0 %v420
  %v544 = vpop.f32.mrf.mxu0
  %v545 = vadd.f32 0.0, %v544
  %546 = vmatmul.f32.gmra.mxu0 %v423
  %v547 = vpop.f32.mrf.mxu0
  %v548 = vadd.f32 0.0, %v547
  %549 = vmatmul.f32.gmra.mxu0 %v426
  %v550 = vpop.f32.mrf.mxu0
  %v551 = vadd.f32 0.0, %v550
  %552 = vmatmul.f32.gmra.mxu0 %v429
  %v553 = vpop.f32.mrf.mxu0
  %v554 = vadd.f32 0.0, %v553
  %555 = vmatmul.f32.gmra.mxu0 %v432
  %v556 = vpop.f32.mrf.mxu0
  %v557 = vadd.f32 0.0, %v556
  %558 = vmatmul.f32.gmra.mxu0 %v435
  %v559 = vpop.f32.mrf.mxu0
  %v560 = vadd.f32 0.0, %v559
  %561 = vdwg.mxu0
  %s562 = scalar_lea.vmem %s0, 576
  %v563 = vld [vmem:[%s562] sm:$0xff]
  %v564 = vld [vmem:[%s562 + $0x8] sm:$0xff]
  %v565 = vld [vmem:[%s562 + $0x10] sm:$0xff]
  %v566 = vld [vmem:[%s562 + $0x18] sm:$0xff]
  %v567 = vld [vmem:[%s562 + $0x20] sm:$0xff]
  %v568 = vld [vmem:[%s562 + $0x28] sm:$0xff]
  %v569 = vld [vmem:[%s562 + $0x30] sm:$0xff]
  %v570 = vld [vmem:[%s562 + $0x38] sm:$0xff]
  %v571 = vld [vmem:[%s562 + $0x40] sm:$0xff]
  %v572 = vld [vmem:[%s562 + $0x48] sm:$0xff]
  %v573 = vld [vmem:[%s562 + $0x50] sm:$0xff]
  %v574 = vld [vmem:[%s562 + $0x58] sm:$0xff]
  %v575 = vld [vmem:[%s562 + $0x60] sm:$0xff]
  %v576 = vld [vmem:[%s562 + $0x68] sm:$0xff]
  %v577 = vld [vmem:[%s562 + $0x70] sm:$0xff]
  %v578 = vld [vmem:[%s562 + $0x78] sm:$0xff]
  %v579 = vld [vmem:[%s562 + $0x80] sm:$0xff]
  %v580 = vld [vmem:[%s562 + $0x88] sm:$0xff]
  %v581 = vld [vmem:[%s562 + $0x90] sm:$0xff]
  %v582 = vld [vmem:[%s562 + $0x98] sm:$0xff]
  %v583 = vld [vmem:[%s562 + $0xa0] sm:$0xff]
  %v584 = vld [vmem:[%s562 + $0xa8] sm:$0xff]
  %v585 = vld [vmem:[%s562 + $0xb0] sm:$0xff]
  %v586 = vld [vmem:[%s562 + $0xb8] sm:$0xff]
  %v587 = vld [vmem:[%s562 + $0xc0] sm:$0xff]
  %v588 = vld [vmem:[%s562 + $0xc8] sm:$0xff]
  %v589 = vld [vmem:[%s562 + $0xd0] sm:$0xff]
  %v590 = vld [vmem:[%s562 + $0xd8] sm:$0xff]
  %v591 = vld [vmem:[%s562 + $0xe0] sm:$0xff]
  %v592 = vld [vmem:[%s562 + $0xe8] sm:$0xff]
  %v593 = vld [vmem:[%s562 + $0xf0] sm:$0xff]
  %v594 = vld [vmem:[%s562 + $0xf8] sm:$0xff]
  %v595 = vld [vmem:[%s562 + $0x100] sm:$0xff]
  %v596 = vld [vmem:[%s562 + $0x108] sm:$0xff]
  %v597 = vld [vmem:[%s562 + $0x110] sm:$0xff]
  %v598 = vld [vmem:[%s562 + $0x118] sm:$0xff]
  %v600 = vsel %vm54, %v563, 0
  %v603 = vsel %vm54, %v564, 0
  %v606 = vsel %vm54, %v565, 0
  %v609 = vsel %vm54, %v566, 0
  %v612 = vsel %vm54, %v567, 0
  %v615 = vsel %vm54, %v568, 0
  %v618 = vsel %vm54, %v569, 0
  %v621 = vsel %vm54, %v570, 0
  %v624 = vsel %vm54, %v571, 0
  %v627 = vsel %vm54, %v572, 0
  %v630 = vsel %vm54, %v573, 0
  %v633 = vsel %vm54, %v574, 0
  %v636 = vsel %vm54, %v575, 0
  %v639 = vsel %vm54, %v576, 0
  %v642 = vsel %vm54, %v577, 0
  %v645 = vsel %vm54, %v578, 0
  %v648 = vsel %vm54, %v579, 0
  %v651 = vsel %vm54, %v580, 0
  %v654 = vsel %vm54, %v581, 0
  %v657 = vsel %vm54, %v582, 0
  %v660 = vsel %vm54, %v583, 0
  %v663 = vsel %vm54, %v584, 0
  %v666 = vsel %vm54, %v585, 0
  %v669 = vsel %vm54, %v586, 0
  %v672 = vsel %vm54, %v587, 0
  %v675 = vsel %vm54, %v588, 0
  %v678 = vsel %vm54, %v589, 0
  %v681 = vsel %vm54, %v590, 0
  %v684 = vsel %vm54, %v591, 0
  %v687 = vsel %vm54, %v592, 0
  %v690 = vsel %vm54, %v593, 0
  %v693 = vsel %vm54, %v594, 0
  %v696 = vsel %vm54, %v595, 0
  %v699 = vsel %vm54, %v596, 0
  %v702 = vsel %vm54, %v597, 0
  %v705 = vsel %vm54, %v598, 0
  %707 = vmatpush.msra.mxu0 0.0
  %708 = vmatpush.msra.mxu0 0.0
  %709 = vmatpush.msra.mxu0 0.0
  %710 = vmatpush.msra.mxu0 0.0
  %711 = vmatpush.msra.mxu0 0.0
  %712 = vmatpush.msra.mxu0 0.0
  %713 = vmatpush.msra.mxu0 0.0
  %714 = vmatpush.msra.mxu0 0.0
  %715 = vmatpush.msra.mxu0 0.0
  %716 = vmatpush.msra.mxu0 0.0
  %717 = vmatpush.msra.mxu0 0.0
  %718 = vmatpush.msra.mxu0 0.0
  %719 = vmatpush.msra.mxu0 %v165
  %720 = vmatpush.msra.mxu0 %v16
  %721 = vmatpush.msra.mxu0 %v15
  %722 = vmatpush.msra.mxu0 %v14
  %723 = vmatmul.f32.gmra.mxu0 %v600
  %v724 = vpop.f32.mrf.mxu0
  %v725 = vadd.f32 0.0, %v724
  %726 = vmatmul.f32.gmra.mxu0 %v603
  %v727 = vpop.f32.mrf.mxu0
  %v728 = vadd.f32 0.0, %v727
  %729 = vmatmul.f32.gmra.mxu0 %v606
  %v730 = vpop.f32.mrf.mxu0
  %v731 = vadd.f32 0.0, %v730
  %732 = vmatmul.f32.gmra.mxu0 %v609
  %v733 = vpop.f32.mrf.mxu0
  %v734 = vadd.f32 0.0, %v733
  %735 = vmatmul.f32.gmra.mxu0 %v612
  %v736 = vpop.f32.mrf.mxu0
  %v737 = vadd.f32 0.0, %v736
  %738 = vmatmul.f32.gmra.mxu0 %v615
  %v739 = vpop.f32.mrf.mxu0
  %v740 = vadd.f32 0.0, %v739
  %741 = vmatmul.f32.gmra.mxu0 %v618
  %v742 = vpop.f32.mrf.mxu0
  %v743 = vadd.f32 0.0, %v742
  %744 = vmatmul.f32.gmra.mxu0 %v621
  %v745 = vpop.f32.mrf.mxu0
  %v746 = vadd.f32 0.0, %v745
  %747 = vmatmul.f32.gmra.mxu0 %v624
  %v748 = vpop.f32.mrf.mxu0
  %v749 = vadd.f32 0.0, %v748
  %750 = vmatmul.f32.gmra.mxu0 %v627
  %v751 = vpop.f32.mrf.mxu0
  %v752 = vadd.f32 0.0, %v751
  %753 = vmatmul.f32.gmra.mxu0 %v630
  %v754 = vpop.f32.mrf.mxu0
  %v755 = vadd.f32 0.0, %v754
  %756 = vmatmul.f32.gmra.mxu0 %v633
  %v757 = vpop.f32.mrf.mxu0
  %v758 = vadd.f32 0.0, %v757
  %759 = vmatmul.f32.gmra.mxu0 %v636
  %v760 = vpop.f32.mrf.mxu0
  %v761 = vadd.f32 0.0, %v760
  %762 = vmatmul.f32.gmra.mxu0 %v639
  %v763 = vpop.f32.mrf.mxu0
  %v764 = vadd.f32 0.0, %v763
  %765 = vmatmul.f32.gmra.mxu0 %v642
  %v766 = vpop.f32.mrf.mxu0
  %v767 = vadd.f32 0.0, %v766
  %768 = vmatmul.f32.gmra.mxu0 %v645
  %v769 = vpop.f32.mrf.mxu0
  %v770 = vadd.f32 0.0, %v769
  %771 = vmatmul.f32.gmra.mxu0 %v648
  %v772 = vpop.f32.mrf.mxu0
  %v773 = vadd.f32 0.0, %v772
  %774 = vmatmul.f32.gmra.mxu0 %v651
  %v775 = vpop.f32.mrf.mxu0
  %v776 = vadd.f32 0.0, %v775
  %777 = vmatmul.f32.gmra.mxu0 %v654
  %v778 = vpop.f32.mrf.mxu0
  %v779 = vadd.f32 0.0, %v778
  %780 = vmatmul.f32.gmra.mxu0 %v657
  %v781 = vpop.f32.mrf.mxu0
  %v782 = vadd.f32 0.0, %v781
  %783 = vmatmul.f32.gmra.mxu0 %v660
  %v784 = vpop.f32.mrf.mxu0
  %v785 = vadd.f32 0.0, %v784
  %786 = vmatmul.f32.gmra.mxu0 %v663
  %v787 = vpop.f32.mrf.mxu0
  %v788 = vadd.f32 0.0, %v787
  %789 = vmatmul.f32.gmra.mxu0 %v666
  %v790 = vpop.f32.mrf.mxu0
  %v791 = vadd.f32 0.0, %v790
  %792 = vmatmul.f32.gmra.mxu0 %v669
  %v793 = vpop.f32.mrf.mxu0
  %v794 = vadd.f32 0.0, %v793
  %795 = vmatmul.f32.gmra.mxu0 %v672
  %v796 = vpop.f32.mrf.mxu0
  %v797 = vadd.f32 0.0, %v796
  %798 = vmatmul.f32.gmra.mxu0 %v675
  %v799 = vpop.f32.mrf.mxu0
  %v800 = vadd.f32 0.0, %v799
  %801 = vmatmul.f32.gmra.mxu0 %v678
  %v802 = vpop.f32.mrf.mxu0
  %v803 = vadd.f32 0.0, %v802
  %804 = vmatmul.f32.gmra.mxu0 %v681
  %v805 = vpop.f32.mrf.mxu0
  %v806 = vadd.f32 0.0, %v805
  %807 = vmatmul.f32.gmra.mxu0 %v684
  %v808 = vpop.f32.mrf.mxu0
  %v809 = vadd.f32 0.0, %v808
  %810 = vmatmul.f32.gmra.mxu0 %v687
  %v811 = vpop.f32.mrf.mxu0
  %v812 = vadd.f32 0.0, %v811
  %813 = vmatmul.f32.gmra.mxu0 %v690
  %v814 = vpop.f32.mrf.mxu0
  %v815 = vadd.f32 0.0, %v814
  %816 = vmatmul.f32.gmra.mxu0 %v693
  %v817 = vpop.f32.mrf.mxu0
  %v818 = vadd.f32 0.0, %v817
  %819 = vmatmul.f32.gmra.mxu0 %v696
  %v820 = vpop.f32.mrf.mxu0
  %v821 = vadd.f32 0.0, %v820
  %822 = vmatmul.f32.gmra.mxu0 %v699
  %v823 = vpop.f32.mrf.mxu0
  %v824 = vadd.f32 0.0, %v823
  %825 = vmatmul.f32.gmra.mxu0 %v702
  %v826 = vpop.f32.mrf.mxu0
  %v827 = vadd.f32 0.0, %v826
  %828 = vmatmul.f32.gmra.mxu0 %v705
  %v829 = vpop.f32.mrf.mxu0
  %v830 = vadd.f32 0.0, %v829
  %831 = vdwg.mxu0
  %s832 = scalar_lea.vmem %s0, 864
  %v833 = vld [vmem:[%s832] sm:$0xff]
  %v834 = vld [vmem:[%s832 + $0x8] sm:$0xff]
  %v835 = vld [vmem:[%s832 + $0x10] sm:$0xff]
  %v836 = vld [vmem:[%s832 + $0x18] sm:$0xff]
  %v837 = vld [vmem:[%s832 + $0x20] sm:$0xff]
  %v838 = vld [vmem:[%s832 + $0x28] sm:$0xff]
  %v839 = vld [vmem:[%s832 + $0x30] sm:$0xff]
  %v840 = vld [vmem:[%s832 + $0x38] sm:$0xff]
  %v841 = vld [vmem:[%s832 + $0x40] sm:$0xff]
  %v842 = vld [vmem:[%s832 + $0x48] sm:$0xff]
  %v843 = vld [vmem:[%s832 + $0x50] sm:$0xff]
  %v844 = vld [vmem:[%s832 + $0x58] sm:$0xff]
  %v845 = vld [vmem:[%s832 + $0x60] sm:$0xff]
  %v846 = vld [vmem:[%s832 + $0x68] sm:$0xff]
  %v847 = vld [vmem:[%s832 + $0x70] sm:$0xff]
  %v848 = vld [vmem:[%s832 + $0x78] sm:$0xff]
  %v849 = vld [vmem:[%s832 + $0x80] sm:$0xff]
  %v850 = vld [vmem:[%s832 + $0x88] sm:$0xff]
  %v851 = vld [vmem:[%s832 + $0x90] sm:$0xff]
  %v852 = vld [vmem:[%s832 + $0x98] sm:$0xff]
  %v853 = vld [vmem:[%s832 + $0xa0] sm:$0xff]
  %v854 = vld [vmem:[%s832 + $0xa8] sm:$0xff]
  %v855 = vld [vmem:[%s832 + $0xb0] sm:$0xff]
  %v856 = vld [vmem:[%s832 + $0xb8] sm:$0xff]
  %v857 = vld [vmem:[%s832 + $0xc0] sm:$0xff]
  %v858 = vld [vmem:[%s832 + $0xc8] sm:$0xff]
  %v859 = vld [vmem:[%s832 + $0xd0] sm:$0xff]
  %v860 = vld [vmem:[%s832 + $0xd8] sm:$0xff]
  %v861 = vld [vmem:[%s832 + $0xe0] sm:$0xff]
  %v862 = vld [vmem:[%s832 + $0xe8] sm:$0xff]
  %v863 = vld [vmem:[%s832 + $0xf0] sm:$0xff]
  %v864 = vld [vmem:[%s832 + $0xf8] sm:$0xff]
  %v865 = vld [vmem:[%s832 + $0x100] sm:$0xff]
  %v866 = vld [vmem:[%s832 + $0x108] sm:$0xff]
  %v867 = vld [vmem:[%s832 + $0x110] sm:$0xff]
  %v868 = vld [vmem:[%s832 + $0x118] sm:$0xff]
  %v870 = vsel %vm54, %v833, 0
  %v873 = vsel %vm54, %v834, 0
  %v876 = vsel %vm54, %v835, 0
  %v879 = vsel %vm54, %v836, 0
  %v882 = vsel %vm54, %v837, 0
  %v885 = vsel %vm54, %v838, 0
  %v888 = vsel %vm54, %v839, 0
  %v891 = vsel %vm54, %v840, 0
  %v894 = vsel %vm54, %v841, 0
  %v897 = vsel %vm54, %v842, 0
  %v900 = vsel %vm54, %v843, 0
  %v903 = vsel %vm54, %v844, 0
  %v906 = vsel %vm54, %v845, 0
  %v909 = vsel %vm54, %v846, 0
  %v912 = vsel %vm54, %v847, 0
  %v915 = vsel %vm54, %v848, 0
  %v918 = vsel %vm54, %v849, 0
  %v921 = vsel %vm54, %v850, 0
  %v924 = vsel %vm54, %v851, 0
  %v927 = vsel %vm54, %v852, 0
  %v930 = vsel %vm54, %v853, 0
  %v933 = vsel %vm54, %v854, 0
  %v936 = vsel %vm54, %v855, 0
  %v939 = vsel %vm54, %v856, 0
  %v942 = vsel %vm54, %v857, 0
  %v945 = vsel %vm54, %v858, 0
  %v948 = vsel %vm54, %v859, 0
  %v951 = vsel %vm54, %v860, 0
  %v954 = vsel %vm54, %v861, 0
  %v957 = vsel %vm54, %v862, 0
  %v960 = vsel %vm54, %v863, 0
  %v963 = vsel %vm54, %v864, 0
  %v966 = vsel %vm54, %v865, 0
  %v969 = vsel %vm54, %v866, 0
  %v972 = vsel %vm54, %v867, 0
  %v975 = vsel %vm54, %v868, 0
  %977 = vmatpush.msra.mxu0 0.0
  %978 = vmatpush.msra.mxu0 0.0
  %979 = vmatpush.msra.mxu0 0.0
  %980 = vmatpush.msra.mxu0 0.0
  %981 = vmatpush.msra.mxu0 0.0
  %982 = vmatpush.msra.mxu0 0.0
  %983 = vmatpush.msra.mxu0 0.0
  %984 = vmatpush.msra.mxu0 0.0
  %985 = vmatpush.msra.mxu0 0.0
  %986 = vmatpush.msra.mxu0 0.0
  %987 = vmatpush.msra.mxu0 0.0
  %988 = vmatpush.msra.mxu0 0.0
  %989 = vmatpush.msra.mxu0 %v165
  %990 = vmatpush.msra.mxu0 %v16
  %991 = vmatpush.msra.mxu0 %v15
  %992 = vmatpush.msra.mxu0 %v14
  %993 = vmatmul.f32.gmra.mxu0 %v870
  %v994 = vpop.f32.mrf.mxu0
  %v995 = vadd.f32 0.0, %v994
  %996 = vmatmul.f32.gmra.mxu0 %v873
  %v997 = vpop.f32.mrf.mxu0
  %v998 = vadd.f32 0.0, %v997
  %999 = vmatmul.f32.gmra.mxu0 %v876
  %v1000 = vpop.f32.mrf.mxu0
  %v1001 = vadd.f32 0.0, %v1000
  %1002 = vmatmul.f32.gmra.mxu0 %v879
  %v1003 = vpop.f32.mrf.mxu0
  %v1004 = vadd.f32 0.0, %v1003
  %1005 = vmatmul.f32.gmra.mxu0 %v882
  %v1006 = vpop.f32.mrf.mxu0
  %v1007 = vadd.f32 0.0, %v1006
  %1008 = vmatmul.f32.gmra.mxu0 %v885
  %v1009 = vpop.f32.mrf.mxu0
  %v1010 = vadd.f32 0.0, %v1009
  %1011 = vmatmul.f32.gmra.mxu0 %v888
  %v1012 = vpop.f32.mrf.mxu0
  %v1013 = vadd.f32 0.0, %v1012
  %1014 = vmatmul.f32.gmra.mxu0 %v891
  %v1015 = vpop.f32.mrf.mxu0
  %v1016 = vadd.f32 0.0, %v1015
  %1017 = vmatmul.f32.gmra.mxu0 %v894
  %v1018 = vpop.f32.mrf.mxu0
  %v1019 = vadd.f32 0.0, %v1018
  %1020 = vmatmul.f32.gmra.mxu0 %v897
  %v1021 = vpop.f32.mrf.mxu0
  %v1022 = vadd.f32 0.0, %v1021
  %1023 = vmatmul.f32.gmra.mxu0 %v900
  %v1024 = vpop.f32.mrf.mxu0
  %v1025 = vadd.f32 0.0, %v1024
  %1026 = vmatmul.f32.gmra.mxu0 %v903
  %v1027 = vpop.f32.mrf.mxu0
  %v1028 = vadd.f32 0.0, %v1027
  %1029 = vmatmul.f32.gmra.mxu0 %v906
  %v1030 = vpop.f32.mrf.mxu0
  %v1031 = vadd.f32 0.0, %v1030
  %1032 = vmatmul.f32.gmra.mxu0 %v909
  %v1033 = vpop.f32.mrf.mxu0
  %v1034 = vadd.f32 0.0, %v1033
  %1035 = vmatmul.f32.gmra.mxu0 %v912
  %v1036 = vpop.f32.mrf.mxu0
  %v1037 = vadd.f32 0.0, %v1036
  %1038 = vmatmul.f32.gmra.mxu0 %v915
  %v1039 = vpop.f32.mrf.mxu0
  %v1040 = vadd.f32 0.0, %v1039
  %1041 = vmatmul.f32.gmra.mxu0 %v918
  %v1042 = vpop.f32.mrf.mxu0
  %v1043 = vadd.f32 0.0, %v1042
  %1044 = vmatmul.f32.gmra.mxu0 %v921
  %v1045 = vpop.f32.mrf.mxu0
  %v1046 = vadd.f32 0.0, %v1045
  %1047 = vmatmul.f32.gmra.mxu0 %v924
  %v1048 = vpop.f32.mrf.mxu0
  %v1049 = vadd.f32 0.0, %v1048
  %1050 = vmatmul.f32.gmra.mxu0 %v927
  %v1051 = vpop.f32.mrf.mxu0
  %v1052 = vadd.f32 0.0, %v1051
  %1053 = vmatmul.f32.gmra.mxu0 %v930
  %v1054 = vpop.f32.mrf.mxu0
  %v1055 = vadd.f32 0.0, %v1054
  %1056 = vmatmul.f32.gmra.mxu0 %v933
  %v1057 = vpop.f32.mrf.mxu0
  %v1058 = vadd.f32 0.0, %v1057
  %1059 = vmatmul.f32.gmra.mxu0 %v936
  %v1060 = vpop.f32.mrf.mxu0
  %v1061 = vadd.f32 0.0, %v1060
  %1062 = vmatmul.f32.gmra.mxu0 %v939
  %v1063 = vpop.f32.mrf.mxu0
  %v1064 = vadd.f32 0.0, %v1063
  %1065 = vmatmul.f32.gmra.mxu0 %v942
  %v1066 = vpop.f32.mrf.mxu0
  %v1067 = vadd.f32 0.0, %v1066
  %1068 = vmatmul.f32.gmra.mxu0 %v945
  %v1069 = vpop.f32.mrf.mxu0
  %v1070 = vadd.f32 0.0, %v1069
  %1071 = vmatmul.f32.gmra.mxu0 %v948
  %v1072 = vpop.f32.mrf.mxu0
  %v1073 = vadd.f32 0.0, %v1072
  %1074 = vmatmul.f32.gmra.mxu0 %v951
  %v1075 = vpop.f32.mrf.mxu0
  %v1076 = vadd.f32 0.0, %v1075
  %1077 = vmatmul.f32.gmra.mxu0 %v954
  %v1078 = vpop.f32.mrf.mxu0
  %v1079 = vadd.f32 0.0, %v1078
  %1080 = vmatmul.f32.gmra.mxu0 %v957
  %v1081 = vpop.f32.mrf.mxu0
  %v1082 = vadd.f32 0.0, %v1081
  %1083 = vmatmul.f32.gmra.mxu0 %v960
  %v1084 = vpop.f32.mrf.mxu0
  %v1085 = vadd.f32 0.0, %v1084
  %1086 = vmatmul.f32.gmra.mxu0 %v963
  %v1087 = vpop.f32.mrf.mxu0
  %v1088 = vadd.f32 0.0, %v1087
  %1089 = vmatmul.f32.gmra.mxu0 %v966
  %v1090 = vpop.f32.mrf.mxu0
  %v1091 = vadd.f32 0.0, %v1090
  %1092 = vmatmul.f32.gmra.mxu0 %v969
  %v1093 = vpop.f32.mrf.mxu0
  %v1094 = vadd.f32 0.0, %v1093
  %1095 = vmatmul.f32.gmra.mxu0 %v972
  %v1096 = vpop.f32.mrf.mxu0
  %v1097 = vadd.f32 0.0, %v1096
  %1098 = vmatmul.f32.gmra.mxu0 %v975
  %v1099 = vpop.f32.mrf.mxu0
  %v1100 = vadd.f32 0.0, %v1099
  %1101 = vdwg.mxu0
  %v1102 = vmax.f32 %v185, %v455
  %v1103 = vmax.f32 %v188, %v458
  %v1104 = vmax.f32 %v191, %v461
  %v1105 = vmax.f32 %v194, %v464
  %v1106 = vmax.f32 %v197, %v467
  %v1107 = vmax.f32 %v200, %v470
  %v1108 = vmax.f32 %v203, %v473
  %v1109 = vmax.f32 %v206, %v476
  %v1110 = vmax.f32 %v209, %v479
  %v1111 = vmax.f32 %v212, %v482
  %v1112 = vmax.f32 %v215, %v485
  %v1113 = vmax.f32 %v218, %v488
  %v1114 = vmax.f32 %v221, %v491
  %v1115 = vmax.f32 %v224, %v494
  %v1116 = vmax.f32 %v227, %v497
  %v1117 = vmax.f32 %v230, %v500
  %v1118 = vmax.f32 %v233, %v503
  %v1119 = vmax.f32 %v236, %v506
  %v1120 = vmax.f32 %v239, %v509
  %v1121 = vmax.f32 %v242, %v512
  %v1122 = vmax.f32 %v245, %v515
  %v1123 = vmax.f32 %v248, %v518
  %v1124 = vmax.f32 %v251, %v521
  %v1125 = vmax.f32 %v254, %v524
  %v1126 = vmax.f32 %v257, %v527
  %v1127 = vmax.f32 %v260, %v530
  %v1128 = vmax.f32 %v263, %v533
  %v1129 = vmax.f32 %v266, %v536
  %v1130 = vmax.f32 %v269, %v539
  %v1131 = vmax.f32 %v272, %v542
  %v1132 = vmax.f32 %v275, %v545
  %v1133 = vmax.f32 %v278, %v548
  %v1134 = vmax.f32 %v281, %v551
  %v1135 = vmax.f32 %v284, %v554
  %v1136 = vmax.f32 %v287, %v557
  %v1137 = vmax.f32 %v290, %v560
  %v1138 = vmax.f32 %v725, %v995
  %v1139 = vmax.f32 %v728, %v998
  %v1140 = vmax.f32 %v731, %v1001
  %v1141 = vmax.f32 %v734, %v1004
  %v1142 = vmax.f32 %v737, %v1007
  %v1143 = vmax.f32 %v740, %v1010
  %v1144 = vmax.f32 %v743, %v1013
  %v1145 = vmax.f32 %v746, %v1016
  %v1146 = vmax.f32 %v749, %v1019
  %v1147 = vmax.f32 %v752, %v1022
  %v1148 = vmax.f32 %v755, %v1025
  %v1149 = vmax.f32 %v758, %v1028
  %v1150 = vmax.f32 %v761, %v1031
  %v1151 = vmax.f32 %v764, %v1034
  %v1152 = vmax.f32 %v767, %v1037
  %v1153 = vmax.f32 %v770, %v1040
  %v1154 = vmax.f32 %v773, %v1043
  %v1155 = vmax.f32 %v776, %v1046
  %v1156 = vmax.f32 %v779, %v1049
  %v1157 = vmax.f32 %v782, %v1052
  %v1158 = vmax.f32 %v785, %v1055
  %v1159 = vmax.f32 %v788, %v1058
  %v1160 = vmax.f32 %v791, %v1061
  %v1161 = vmax.f32 %v794, %v1064
  %v1162 = vmax.f32 %v797, %v1067
  %v1163 = vmax.f32 %v800, %v1070
  %v1164 = vmax.f32 %v803, %v1073
  %v1165 = vmax.f32 %v806, %v1076
  %v1166 = vmax.f32 %v809, %v1079
  %v1167 = vmax.f32 %v812, %v1082
  %v1168 = vmax.f32 %v815, %v1085
  %v1169 = vmax.f32 %v818, %v1088
  %v1170 = vmax.f32 %v821, %v1091
  %v1171 = vmax.f32 %v824, %v1094
  %v1172 = vmax.f32 %v827, %v1097
  %v1173 = vmax.f32 %v830, %v1100
  %v1174 = vmax.f32 %v1102, %v1138
  %v1175 = vmax.f32 %v1103, %v1139
  %v1176 = vmax.f32 %v1104, %v1140
  %v1177 = vmax.f32 %v1105, %v1141
  %v1178 = vmax.f32 %v1106, %v1142
  %v1179 = vmax.f32 %v1107, %v1143
  %v1180 = vmax.f32 %v1108, %v1144
  %v1181 = vmax.f32 %v1109, %v1145
  %v1182 = vmax.f32 %v1110, %v1146
  %v1183 = vmax.f32 %v1111, %v1147
  %v1184 = vmax.f32 %v1112, %v1148
  %v1185 = vmax.f32 %v1113, %v1149
  %v1186 = vmax.f32 %v1114, %v1150
  %v1187 = vmax.f32 %v1115, %v1151
  %v1188 = vmax.f32 %v1116, %v1152
  %v1189 = vmax.f32 %v1117, %v1153
  %v1190 = vmax.f32 %v1118, %v1154
  %v1191 = vmax.f32 %v1119, %v1155
  %v1192 = vmax.f32 %v1120, %v1156
  %v1193 = vmax.f32 %v1121, %v1157
  %v1194 = vmax.f32 %v1122, %v1158
  %v1195 = vmax.f32 %v1123, %v1159
  %v1196 = vmax.f32 %v1124, %v1160
  %v1197 = vmax.f32 %v1125, %v1161
  %v1198 = vmax.f32 %v1126, %v1162
  %v1199 = vmax.f32 %v1127, %v1163
  %v1200 = vmax.f32 %v1128, %v1164
  %v1201 = vmax.f32 %v1129, %v1165
  %v1202 = vmax.f32 %v1130, %v1166
  %v1203 = vmax.f32 %v1131, %v1167
  %v1204 = vmax.f32 %v1132, %v1168
  %v1205 = vmax.f32 %v1133, %v1169
  %v1206 = vmax.f32 %v1134, %v1170
  %v1207 = vmax.f32 %v1135, %v1171
  %v1208 = vmax.f32 %v1136, %v1172
  %v1209 = vmax.f32 %v1137, %v1173
  %v1210 = vld [vmem:[%s2] sm:$0x1]
  %v1212 = vperm.slane %v1210, 0
  %v1214 = vadd.f32 %v1174, %v1212
  %v1215 = vadd.f32 %v1175, %v1212
  %v1216 = vadd.f32 %v1176, %v1212
  %v1217 = vadd.f32 %v1177, %v1212
  %v1218 = vadd.f32 %v1178, %v1212
  %v1219 = vadd.f32 %v1179, %v1212
  %v1220 = vadd.f32 %v1180, %v1212
  %v1221 = vadd.f32 %v1181, %v1212
  %v1222 = vadd.f32 %v1182, %v1212
  %v1223 = vadd.f32 %v1183, %v1212
  %v1224 = vadd.f32 %v1184, %v1212
  %v1225 = vadd.f32 %v1185, %v1212
  %v1226 = vadd.f32 %v1186, %v1212
  %v1227 = vadd.f32 %v1187, %v1212
  %v1228 = vadd.f32 %v1188, %v1212
  %v1229 = vadd.f32 %v1189, %v1212
  %v1230 = vadd.f32 %v1190, %v1212
  %v1231 = vadd.f32 %v1191, %v1212
  %v1232 = vadd.f32 %v1192, %v1212
  %v1233 = vadd.f32 %v1193, %v1212
  %v1234 = vadd.f32 %v1194, %v1212
  %v1235 = vadd.f32 %v1195, %v1212
  %v1236 = vadd.f32 %v1196, %v1212
  %v1237 = vadd.f32 %v1197, %v1212
  %v1238 = vadd.f32 %v1198, %v1212
  %v1239 = vadd.f32 %v1199, %v1212
  %v1240 = vadd.f32 %v1200, %v1212
  %v1241 = vadd.f32 %v1201, %v1212
  %v1242 = vadd.f32 %v1202, %v1212
  %v1243 = vadd.f32 %v1203, %v1212
  %v1244 = vadd.f32 %v1204, %v1212
  %v1245 = vadd.f32 %v1205, %v1212
  %v1246 = vadd.f32 %v1206, %v1212
  %v1247 = vadd.f32 %v1207, %v1212
  %v1248 = vadd.f32 %v1208, %v1212
  %v1249 = vadd.f32 %v1209, %v1212
  %v1250 = vmax.f32 %v1214, 0.0
  %v1251 = vmax.f32 %v1215, 0.0
  %v1252 = vmax.f32 %v1216, 0.0
  %v1253 = vmax.f32 %v1217, 0.0
  %v1254 = vmax.f32 %v1218, 0.0
  %v1255 = vmax.f32 %v1219, 0.0
  %v1256 = vmax.f32 %v1220, 0.0
  %v1257 = vmax.f32 %v1221, 0.0
  %v1258 = vmax.f32 %v1222, 0.0
  %v1259 = vmax.f32 %v1223, 0.0
  %v1260 = vmax.f32 %v1224, 0.0
  %v1261 = vmax.f32 %v1225, 0.0
  %v1262 = vmax.f32 %v1226, 0.0
  %v1263 = vmax.f32 %v1227, 0.0
  %v1264 = vmax.f32 %v1228, 0.0
  %v1265 = vmax.f32 %v1229, 0.0
  %v1266 = vmax.f32 %v1230, 0.0
  %v1267 = vmax.f32 %v1231, 0.0
  %v1268 = vmax.f32 %v1232, 0.0
  %v1269 = vmax.f32 %v1233, 0.0
  %v1270 = vmax.f32 %v1234, 0.0
  %v1271 = vmax.f32 %v1235, 0.0
  %v1272 = vmax.f32 %v1236, 0.0
  %v1273 = vmax.f32 %v1237, 0.0
  %v1274 = vmax.f32 %v1238, 0.0
  %v1275 = vmax.f32 %v1239, 0.0
  %v1276 = vmax.f32 %v1240, 0.0
  %v1277 = vmax.f32 %v1241, 0.0
  %v1278 = vmax.f32 %v1242, 0.0
  %v1279 = vmax.f32 %v1243, 0.0
  %v1280 = vmax.f32 %v1244, 0.0
  %v1281 = vmax.f32 %v1245, 0.0
  %v1282 = vmax.f32 %v1246, 0.0
  %v1283 = vmax.f32 %v1247, 0.0
  %v1284 = vmax.f32 %v1248, 0.0
  %v1285 = vmax.f32 %v1249, 0.0
  %vm1286 = vcmask 80896
  %1287 = vst.msk [vmem:[%s3] sm:$0xff] %vm1286, %v1250
  %1288 = vst.msk [vmem:[%s3 + $0x8] sm:$0xff] %vm1286, %v1251
  %1289 = vst.msk [vmem:[%s3 + $0x10] sm:$0xff] %vm1286, %v1252
  %1290 = vst.msk [vmem:[%s3 + $0x18] sm:$0xff] %vm1286, %v1253
  %1291 = vst.msk [vmem:[%s3 + $0x20] sm:$0xff] %vm1286, %v1254
  %1292 = vst.msk [vmem:[%s3 + $0x28] sm:$0xff] %vm1286, %v1255
  %1293 = vst.msk [vmem:[%s3 + $0x30] sm:$0xff] %vm1286, %v1256
  %1294 = vst.msk [vmem:[%s3 + $0x38] sm:$0xff] %vm1286, %v1257
  %1295 = vst.msk [vmem:[%s3 + $0x40] sm:$0xff] %vm1286, %v1258
  %1296 = vst.msk [vmem:[%s3 + $0x48] sm:$0xff] %vm1286, %v1259
  %1297 = vst.msk [vmem:[%s3 + $0x50] sm:$0xff] %vm1286, %v1260
  %1298 = vst.msk [vmem:[%s3 + $0x58] sm:$0xff] %vm1286, %v1261
  %1299 = vst.msk [vmem:[%s3 + $0x60] sm:$0xff] %vm1286, %v1262
  %1300 = vst.msk [vmem:[%s3 + $0x68] sm:$0xff] %vm1286, %v1263
  %1301 = vst.msk [vmem:[%s3 + $0x70] sm:$0xff] %vm1286, %v1264
  %1302 = vst.msk [vmem:[%s3 + $0x78] sm:$0xff] %vm1286, %v1265
  %1303 = vst.msk [vmem:[%s3 + $0x80] sm:$0xff] %vm1286, %v1266
  %1304 = vst.msk [vmem:[%s3 + $0x88] sm:$0xff] %vm1286, %v1267
  %1305 = vst.msk [vmem:[%s3 + $0x90] sm:$0xff] %vm1286, %v1268
  %1306 = vst.msk [vmem:[%s3 + $0x98] sm:$0xff] %vm1286, %v1269
  %1307 = vst.msk [vmem:[%s3 + $0xa0] sm:$0xff] %vm1286, %v1270
  %1308 = vst.msk [vmem:[%s3 + $0xa8] sm:$0xff] %vm1286, %v1271
  %1309 = vst.msk [vmem:[%s3 + $0xb0] sm:$0xff] %vm1286, %v1272
  %1310 = vst.msk [vmem:[%s3 + $0xb8] sm:$0xff] %vm1286, %v1273
  %1311 = vst.msk [vmem:[%s3 + $0xc0] sm:$0xff] %vm1286, %v1274
  %1312 = vst.msk [vmem:[%s3 + $0xc8] sm:$0xff] %vm1286, %v1275
  %1313 = vst.msk [vmem:[%s3 + $0xd0] sm:$0xff] %vm1286, %v1276
  %1314 = vst.msk [vmem:[%s3 + $0xd8] sm:$0xff] %vm1286, %v1277
  %1315 = vst.msk [vmem:[%s3 + $0xe0] sm:$0xff] %vm1286, %v1278
  %1316 = vst.msk [vmem:[%s3 + $0xe8] sm:$0xff] %vm1286, %v1279
  %1317 = vst.msk [vmem:[%s3 + $0xf0] sm:$0xff] %vm1286, %v1280
  %1318 = vst.msk [vmem:[%s3 + $0xf8] sm:$0xff] %vm1286, %v1281
  %1319 = vst.msk [vmem:[%s3 + $0x100] sm:$0xff] %vm1286, %v1282
  %1320 = vst.msk [vmem:[%s3 + $0x108] sm:$0xff] %vm1286, %v1283
  %1321 = vst.msk [vmem:[%s3 + $0x110] sm:$0xff] %vm1286, %v1284
  %1322 = vst.msk [vmem:[%s3 + $0x118] sm:$0xff] %vm1286, %v1285
  // Predicated region
  $region14: #{net_forward.3} parent=0 // pred_check
    _
  $region15: #{net_forward.3} parent=0 // pred_check_branch
    %1324 = sbr.rel (0) target = $region17
  $region16: #{net_forward.3} parent=0 // pred_region
    _
  $region17: #{net_forward.3} parent=0 // pred_fallthru
    _
  // Predicated region
  $region18: #{net_forward.3} parent=0 // pred_check
    _
  $region19: #{net_forward.3} parent=0 // pred_check_branch
    %1326 = sbr.rel (0) target = $region21
  $region20: #{net_forward.3} parent=0 // pred_region
    _
  $region21: #{net_forward.3} parent=0 // pred_fallthru
    _

// kernel: net_forward.4
$region0: #{net_forward.4}
  #allocation0 [shape = 'u32[]', space=smem, size = 0x4, offset = 0x4, fixed_abs, tag = 'smem constant byte address 0x4 - core index']
  #allocation1 [shape = 'u32[72,128]{1,0:T(1,128)}', space=vmem, size = 0x9000, scoped, tag = 'internal scratch']
  %s0 = inlined_call_operand.vmem [shape: f32[4,56,90], index: 0, kind: input, shape index: {}]
  %s1 = inlined_call_operand.vmem [shape: f32[90,20], index: 1, kind: input, shape index: {}]
  %s2 = inlined_call_operand.vmem [shape: f32[1,20], index: 2, kind: input, shape index: {}]
  %s3 = inlined_call_operand.vmem [shape: f32[56,20], index: 3, kind: output, shape index: {}]
  %s4 = sld [smem:[#allocation0]]
  $region22: #{net_forward.4} parent=0
    _
  %s6 = ssub.s32 1, %s4
  %s7 = scalar_select 0, %s6, %s4
  // Predicated region
  $region2: #{net_forward.4} parent=0 // pred_check
    _
  $region3: #{net_forward.4} parent=0 // pred_check_branch
    %9 = sbr.rel (0) target = $region5
  $region4: #{net_forward.4} parent=0 // pred_region
    _
  $region5: #{net_forward.4} parent=0 // pred_fallthru
    _
  // Predicated region
  $region6: #{net_forward.4} parent=0 // pred_check
    _
  $region7: #{net_forward.4} parent=0 // pred_check_branch
    %11 = sbr.rel (0) target = $region9
  $region8: #{net_forward.4} parent=0 // pred_region
    _
  $region9: #{net_forward.4} parent=0 // pred_fallthru
    _
  // Predicated region
  $region10: #{net_forward.4} parent=0 // pred_check
    _
  $region11: #{net_forward.4} parent=0 // pred_check_branch
    %13 = sbr.rel (0) target = $region13
  $region12: #{net_forward.4} parent=0 // pred_region
    _
  $region13: #{net_forward.4} parent=0 // pred_fallthru
    _
  %v14 = vld [vmem:[%s1] sm:$0xff]
  %v15 = vld [vmem:[%s1 + $0x8] sm:$0xff]
  %v16 = vld [vmem:[%s1 + $0x10] sm:$0xff]
  %v17 = vld [vmem:[%s1 + $0x18] sm:$0xff]
  %v18 = vld [vmem:[%s1 + $0x20] sm:$0xff]
  %v19 = vld [vmem:[%s1 + $0x28] sm:$0xff]
  %v20 = vld [vmem:[%s1 + $0x30] sm:$0xff]
  %v21 = vld [vmem:[%s1 + $0x38] sm:$0xff]
  %v22 = vld [vmem:[%s1 + $0x40] sm:$0xff]
  %v23 = vld [vmem:[%s1 + $0x48] sm:$0xff]
  %v24 = vld [vmem:[%s1 + $0x50] sm:$0xff]
  %v25 = vld [vmem:[%s1 + $0x58] sm:$0x3]
  %v26 = vld [vmem:[%s0] sm:$0xff]
  %v27 = vld [vmem:[%s0 + $0x8] sm:$0xff]
  %v28 = vld [vmem:[%s0 + $0x10] sm:$0xff]
  %v29 = vld [vmem:[%s0 + $0x18] sm:$0xff]
  %v30 = vld [vmem:[%s0 + $0x20] sm:$0xff]
  %v31 = vld [vmem:[%s0 + $0x28] sm:$0xff]
  %v32 = vld [vmem:[%s0 + $0x30] sm:$0xff]
  %vm33 = vcmask 736256
  %v35 = vsel %vm33, %v26, 0
  %v38 = vsel %vm33, %v27, 0
  %v41 = vsel %vm33, %v28, 0
  %v44 = vsel %vm33, %v29, 0
  %v47 = vsel %vm33, %v30, 0
  %v50 = vsel %vm33, %v31, 0
  %v53 = vsel %vm33, %v32, 0
  %vm55 = vcmask 1041408
  %v57 = vsel %vm55, %v25, 0
  %59 = vmatpush.msra.mxu0 0.0
  %60 = vmatpush.msra.mxu0 0.0
  %61 = vmatpush.msra.mxu0 0.0
  %62 = vmatpush.msra.mxu0 0.0
  %63 = vmatpush.msra.mxu0 %v57
  %64 = vmatpush.msra.mxu0 %v24
  %65 = vmatpush.msra.mxu0 %v23
  %66 = vmatpush.msra.mxu0 %v22
  %67 = vmatpush.msra.mxu0 %v21
  %68 = vmatpush.msra.mxu0 %v20
  %69 = vmatpush.msra.mxu0 %v19
  %70 = vmatpush.msra.mxu0 %v18
  %71 = vmatpush.msra.mxu0 %v17
  %72 = vmatpush.msra.mxu0 %v16
  %73 = vmatpush.msra.mxu0 %v15
  %74 = vmatpush.msra.mxu0 %v14
  %75 = vmatmul.f32.gmra.mxu0 %v35
  %v76 = vpop.f32.mrf.mxu0
  %v77 = vadd.f32 0.0, %v76
  %78 = vmatmul.f32.gmra.mxu0 %v38
  %v79 = vpop.f32.mrf.mxu0
  %v80 = vadd.f32 0.0, %v79
  %81 = vmatmul.f32.gmra.mxu0 %v41
  %v82 = vpop.f32.mrf.mxu0
  %v83 = vadd.f32 0.0, %v82
  %84 = vmatmul.f32.gmra.mxu0 %v44
  %v85 = vpop.f32.mrf.mxu0
  %v86 = vadd.f32 0.0, %v85
  %87 = vmatmul.f32.gmra.mxu0 %v47
  %v88 = vpop.f32.mrf.mxu0
  %v89 = vadd.f32 0.0, %v88
  %90 = vmatmul.f32.gmra.mxu0 %v50
  %v91 = vpop.f32.mrf.mxu0
  %v92 = vadd.f32 0.0, %v91
  %93 = vmatmul.f32.gmra.mxu0 %v53
  %v94 = vpop.f32.mrf.mxu0
  %v95 = vadd.f32 0.0, %v94
  %96 = vdwg.mxu0
  %s97 = scalar_lea.vmem %s0, 56
  %v98 = vld [vmem:[%s97] sm:$0xff]
  %v99 = vld [vmem:[%s97 + $0x8] sm:$0xff]
  %v100 = vld [vmem:[%s97 + $0x10] sm:$0xff]
  %v101 = vld [vmem:[%s97 + $0x18] sm:$0xff]
  %v102 = vld [vmem:[%s97 + $0x20] sm:$0xff]
  %v103 = vld [vmem:[%s97 + $0x28] sm:$0xff]
  %v104 = vld [vmem:[%s97 + $0x30] sm:$0xff]
  %v106 = vsel %vm33, %v98, 0
  %v109 = vsel %vm33, %v99, 0
  %v112 = vsel %vm33, %v100, 0
  %v115 = vsel %vm33, %v101, 0
  %v118 = vsel %vm33, %v102, 0
  %v121 = vsel %vm33, %v103, 0
  %v124 = vsel %vm33, %v104, 0
  %126 = vmatpush.msra.mxu0 0.0
  %127 = vmatpush.msra.mxu0 0.0
  %128 = vmatpush.msra.mxu0 0.0
  %129 = vmatpush.msra.mxu0 0.0
  %130 = vmatpush.msra.mxu0 %v57
  %131 = vmatpush.msra.mxu0 %v24
  %132 = vmatpush.msra.mxu0 %v23
  %133 = vmatpush.msra.mxu0 %v22
  %134 = vmatpush.msra.mxu0 %v21
  %135 = vmatpush.msra.mxu0 %v20
  %136 = vmatpush.msra.mxu0 %v19
  %137 = vmatpush.msra.mxu0 %v18
  %138 = vmatpush.msra.mxu0 %v17
  %139 = vmatpush.msra.mxu0 %v16
  %140 = vmatpush.msra.mxu0 %v15
  %141 = vmatpush.msra.mxu0 %v14
  %142 = vmatmul.f32.gmra.mxu0 %v106
  %v143 = vpop.f32.mrf.mxu0
  %v144 = vadd.f32 0.0, %v143
  %145 = vmatmul.f32.gmra.mxu0 %v109
  %v146 = vpop.f32.mrf.mxu0
  %v147 = vadd.f32 0.0, %v146
  %148 = vmatmul.f32.gmra.mxu0 %v112
  %v149 = vpop.f32.mrf.mxu0
  %v150 = vadd.f32 0.0, %v149
  %151 = vmatmul.f32.gmra.mxu0 %v115
  %v152 = vpop.f32.mrf.mxu0
  %v153 = vadd.f32 0.0, %v152
  %154 = vmatmul.f32.gmra.mxu0 %v118
  %v155 = vpop.f32.mrf.mxu0
  %v156 = vadd.f32 0.0, %v155
  %157 = vmatmul.f32.gmra.mxu0 %v121
  %v158 = vpop.f32.mrf.mxu0
  %v159 = vadd.f32 0.0, %v158
  %160 = vmatmul.f32.gmra.mxu0 %v124
  %v161 = vpop.f32.mrf.mxu0
  %v162 = vadd.f32 0.0, %v161
  %163 = vdwg.mxu0
  %s164 = scalar_lea.vmem %s0, 112
  %v165 = vld [vmem:[%s164] sm:$0xff]
  %v166 = vld [vmem:[%s164 + $0x8] sm:$0xff]
  %v167 = vld [vmem:[%s164 + $0x10] sm:$0xff]
  %v168 = vld [vmem:[%s164 + $0x18] sm:$0xff]
  %v169 = vld [vmem:[%s164 + $0x20] sm:$0xff]
  %v170 = vld [vmem:[%s164 + $0x28] sm:$0xff]
  %v171 = vld [vmem:[%s164 + $0x30] sm:$0xff]
  %v173 = vsel %vm33, %v165, 0
  %v176 = vsel %vm33, %v166, 0
  %v179 = vsel %vm33, %v167, 0
  %v182 = vsel %vm33, %v168, 0
  %v185 = vsel %vm33, %v169, 0
  %v188 = vsel %vm33, %v170, 0
  %v191 = vsel %vm33, %v171, 0
  %193 = vmatpush.msra.mxu0 0.0
  %194 = vmatpush.msra.mxu0 0.0
  %195 = vmatpush.msra.mxu0 0.0
  %196 = vmatpush.msra.mxu0 0.0
  %197 = vmatpush.msra.mxu0 %v57
  %198 = vmatpush.msra.mxu0 %v24
  %199 = vmatpush.msra.mxu0 %v23
  %200 = vmatpush.msra.mxu0 %v22
  %201 = vmatpush.msra.mxu0 %v21
  %202 = vmatpush.msra.mxu0 %v20
  %203 = vmatpush.msra.mxu0 %v19
  %204 = vmatpush.msra.mxu0 %v18
  %205 = vmatpush.msra.mxu0 %v17
  %206 = vmatpush.msra.mxu0 %v16
  %207 = vmatpush.msra.mxu0 %v15
  %208 = vmatpush.msra.mxu0 %v14
  %209 = vmatmul.f32.gmra.mxu0 %v173
  %v210 = vpop.f32.mrf.mxu0
  %v211 = vadd.f32 0.0, %v210
  %212 = vmatmul.f32.gmra.mxu0 %v176
  %v213 = vpop.f32.mrf.mxu0
  %v214 = vadd.f32 0.0, %v213
  %215 = vmatmul.f32.gmra.mxu0 %v179
  %v216 = vpop.f32.mrf.mxu0
  %v217 = vadd.f32 0.0, %v216
  %218 = vmatmul.f32.gmra.mxu0 %v182
  %v219 = vpop.f32.mrf.mxu0
  %v220 = vadd.f32 0.0, %v219
  %221 = vmatmul.f32.gmra.mxu0 %v185
  %v222 = vpop.f32.mrf.mxu0
  %v223 = vadd.f32 0.0, %v222
  %224 = vmatmul.f32.gmra.mxu0 %v188
  %v225 = vpop.f32.mrf.mxu0
  %v226 = vadd.f32 0.0, %v225
  %227 = vmatmul.f32.gmra.mxu0 %v191
  %v228 = vpop.f32.mrf.mxu0
  %v229 = vadd.f32 0.0, %v228
  %230 = vdwg.mxu0
  %s231 = scalar_lea.vmem %s0, 168
  %v232 = vld [vmem:[%s231] sm:$0xff]
  %v233 = vld [vmem:[%s231 + $0x8] sm:$0xff]
  %v234 = vld [vmem:[%s231 + $0x10] sm:$0xff]
  %v235 = vld [vmem:[%s231 + $0x18] sm:$0xff]
  %v236 = vld [vmem:[%s231 + $0x20] sm:$0xff]
  %v237 = vld [vmem:[%s231 + $0x28] sm:$0xff]
  %v238 = vld [vmem:[%s231 + $0x30] sm:$0xff]
  %v240 = vsel %vm33, %v232, 0
  %v243 = vsel %vm33, %v233, 0
  %v246 = vsel %vm33, %v234, 0
  %v249 = vsel %vm33, %v235, 0
  %v252 = vsel %vm33, %v236, 0
  %v255 = vsel %vm33, %v237, 0
  %v258 = vsel %vm33, %v238, 0
  %260 = vmatpush.msra.mxu0 0.0
  %261 = vmatpush.msra.mxu0 0.0
  %262 = vmatpush.msra.mxu0 0.0
  %263 = vmatpush.msra.mxu0 0.0
  %264 = vmatpush.msra.mxu0 %v57
  %265 = vmatpush.msra.mxu0 %v24
  %266 = vmatpush.msra.mxu0 %v23
  %267 = vmatpush.msra.mxu0 %v22
  %268 = vmatpush.msra.mxu0 %v21
  %269 = vmatpush.msra.mxu0 %v20
  %270 = vmatpush.msra.mxu0 %v19
  %271 = vmatpush.msra.mxu0 %v18
  %272 = vmatpush.msra.mxu0 %v17
  %273 = vmatpush.msra.mxu0 %v16
  %274 = vmatpush.msra.mxu0 %v15
  %275 = vmatpush.msra.mxu0 %v14
  %276 = vmatmul.f32.gmra.mxu0 %v240
  %v277 = vpop.f32.mrf.mxu0
  %v278 = vadd.f32 0.0, %v277
  %279 = vmatmul.f32.gmra.mxu0 %v243
  %v280 = vpop.f32.mrf.mxu0
  %v281 = vadd.f32 0.0, %v280
  %282 = vmatmul.f32.gmra.mxu0 %v246
  %v283 = vpop.f32.mrf.mxu0
  %v284 = vadd.f32 0.0, %v283
  %285 = vmatmul.f32.gmra.mxu0 %v249
  %v286 = vpop.f32.mrf.mxu0
  %v287 = vadd.f32 0.0, %v286
  %288 = vmatmul.f32.gmra.mxu0 %v252
  %v289 = vpop.f32.mrf.mxu0
  %v290 = vadd.f32 0.0, %v289
  %291 = vmatmul.f32.gmra.mxu0 %v255
  %v292 = vpop.f32.mrf.mxu0
  %v293 = vadd.f32 0.0, %v292
  %294 = vmatmul.f32.gmra.mxu0 %v258
  %v295 = vpop.f32.mrf.mxu0
  %v296 = vadd.f32 0.0, %v295
  %297 = vdwg.mxu0
  %v298 = vmax.f32 %v77, %v144
  %v299 = vmax.f32 %v80, %v147
  %v300 = vmax.f32 %v83, %v150
  %v301 = vmax.f32 %v86, %v153
  %v302 = vmax.f32 %v89, %v156
  %v303 = vmax.f32 %v92, %v159
  %v304 = vmax.f32 %v95, %v162
  %v305 = vmax.f32 %v211, %v278
  %v306 = vmax.f32 %v214, %v281
  %v307 = vmax.f32 %v217, %v284
  %v308 = vmax.f32 %v220, %v287
  %v309 = vmax.f32 %v223, %v290
  %v310 = vmax.f32 %v226, %v293
  %v311 = vmax.f32 %v229, %v296
  %v312 = vmax.f32 %v298, %v305
  %v313 = vmax.f32 %v299, %v306
  %v314 = vmax.f32 %v300, %v307
  %v315 = vmax.f32 %v301, %v308
  %v316 = vmax.f32 %v302, %v309
  %v317 = vmax.f32 %v303, %v310
  %v318 = vmax.f32 %v304, %v311
  %v319 = vld [vmem:[%s2] sm:$0x1]
  %v321 = vperm.slane %v319, 0
  %v323 = vadd.f32 %v312, %v321
  %v324 = vadd.f32 %v313, %v321
  %v325 = vadd.f32 %v314, %v321
  %v326 = vadd.f32 %v315, %v321
  %v327 = vadd.f32 %v316, %v321
  %v328 = vadd.f32 %v317, %v321
  %v329 = vadd.f32 %v318, %v321
  %v330 = vmax.f32 %v323, 0.0
  %v331 = vmax.f32 %v324, 0.0
  %v332 = vmax.f32 %v325, 0.0
  %v333 = vmax.f32 %v326, 0.0
  %v334 = vmax.f32 %v327, 0.0
  %v335 = vmax.f32 %v328, 0.0
  %v336 = vmax.f32 %v329, 0.0
  %vm337 = vcmask 162816
  %338 = vst.msk [vmem:[%s3] sm:$0xff] %vm337, %v330
  %339 = vst.msk [vmem:[%s3 + $0x8] sm:$0xff] %vm337, %v331
  %340 = vst.msk [vmem:[%s3 + $0x10] sm:$0xff] %vm337, %v332
  %341 = vst.msk [vmem:[%s3 + $0x18] sm:$0xff] %vm337, %v333
  %342 = vst.msk [vmem:[%s3 + $0x20] sm:$0xff] %vm337, %v334
  %343 = vst.msk [vmem:[%s3 + $0x28] sm:$0xff] %vm337, %v335
  %344 = vst.msk [vmem:[%s3 + $0x30] sm:$0xff] %vm337, %v336
  // Predicated region
  $region14: #{net_forward.4} parent=0 // pred_check
    _
  $region15: #{net_forward.4} parent=0 // pred_check_branch
    %346 = sbr.rel (0) target = $region17
  $region16: #{net_forward.4} parent=0 // pred_region
    _
  $region17: #{net_forward.4} parent=0 // pred_fallthru
    _
  // Predicated region
  $region18: #{net_forward.4} parent=0 // pred_check
    _
  $region19: #{net_forward.4} parent=0 // pred_check_branch
    %348 = sbr.rel (0) target = $region21
  $region20: #{net_forward.4} parent=0 // pred_region
    _
  $region21: #{net_forward.4} parent=0 // pred_fallthru
    _

// kernel: net_forward.5
$region0: #{net_forward.5}
  #allocation0 [shape = 'u32[]', space=smem, size = 0x4, offset = 0x4, fixed_abs, tag = 'smem constant byte address 0x4 - core index']
  #allocation1 [shape = 'u32[72,128]{1,0:T(1,128)}', space=vmem, size = 0x9000, scoped, tag = 'internal scratch']
  %s0 = inlined_call_operand.vmem [shape: f32[8,500], index: 0, kind: input, shape index: {}]
  %s1 = inlined_call_operand.vmem [shape: f32[500,128], index: 1, kind: input, shape index: {}]
  %s2 = inlined_call_operand.vmem [shape: f32[1,128], index: 2, kind: input, shape index: {}]
  %s3 = inlined_call_operand.vmem [shape: f32[8,128], index: 3, kind: input, shape index: {}]
  %s4 = inlined_call_operand.vmem [shape: f32[128,10], index: 4, kind: input, shape index: {}]
  %s5 = inlined_call_operand.vmem [shape: f32[1,10], index: 5, kind: input, shape index: {}]
  %s6 = inlined_call_operand.vmem [shape: f32[8,10], index: 6, kind: output, shape index: {}]
  %s7 = sld [smem:[#allocation0]]
  $region34: #{net_forward.5} parent=0
    _
  %s9 = ssub.s32 1, %s7
  %s10 = scalar_select 0, %s9, %s7
  // Predicated region
  $region2: #{net_forward.5} parent=0 // pred_check
    _
  $region3: #{net_forward.5} parent=0 // pred_check_branch
    %12 = sbr.rel (0) target = $region5
  $region4: #{net_forward.5} parent=0 // pred_region
    _
  $region5: #{net_forward.5} parent=0 // pred_fallthru
    _
  // Predicated region
  $region6: #{net_forward.5} parent=0 // pred_check
    _
  $region7: #{net_forward.5} parent=0 // pred_check_branch
    %14 = sbr.rel (0) target = $region9
  $region8: #{net_forward.5} parent=0 // pred_region
    _
  $region9: #{net_forward.5} parent=0 // pred_fallthru
    _
  // Predicated region
  $region10: #{net_forward.5} parent=0 // pred_check
    _
  $region11: #{net_forward.5} parent=0 // pred_check_branch
    %16 = sbr.rel (0) target = $region13
  $region12: #{net_forward.5} parent=0 // pred_region
    _
  $region13: #{net_forward.5} parent=0 // pred_fallthru
    _
  // Predicated region
  $region14: #{net_forward.5} parent=0 // pred_check
    _
  $region15: #{net_forward.5} parent=0 // pred_check_branch
    %18 = sbr.rel (0) target = $region17
  $region16: #{net_forward.5} parent=0 // pred_region
    _
  $region17: #{net_forward.5} parent=0 // pred_fallthru
    _
  // Predicated region
  $region18: #{net_forward.5} parent=0 // pred_check
    _
  $region19: #{net_forward.5} parent=0 // pred_check_branch
    %20 = sbr.rel (0) target = $region21
  $region20: #{net_forward.5} parent=0 // pred_region
    _
  $region21: #{net_forward.5} parent=0 // pred_fallthru
    _
  // Predicated region
  $region22: #{net_forward.5} parent=0 // pred_check
    _
  $region23: #{net_forward.5} parent=0 // pred_check_branch
    %22 = sbr.rel (0) target = $region25
  $region24: #{net_forward.5} parent=0 // pred_region
    _
  $region25: #{net_forward.5} parent=0 // pred_fallthru
    _
  %v23 = vld [vmem:[%s0] sm:$0xff]
  %v24 = vld [vmem:[%s0 + $0x8] sm:$0xff]
  %v25 = vld [vmem:[%s0 + $0x10] sm:$0xff]
  %v26 = vld [vmem:[%s0 + $0x18] sm:$0xff]
  %v27 = vld [vmem:[%s1] sm:$0xff]
  %v28 = vld [vmem:[%s1 + $0x8] sm:$0xff]
  %v29 = vld [vmem:[%s1 + $0x10] sm:$0xff]
  %v30 = vld [vmem:[%s1 + $0x18] sm:$0xff]
  %v31 = vld [vmem:[%s1 + $0x20] sm:$0xff]
  %v32 = vld [vmem:[%s1 + $0x28] sm:$0xff]
  %v33 = vld [vmem:[%s1 + $0x30] sm:$0xff]
  %v34 = vld [vmem:[%s1 + $0x38] sm:$0xff]
  %v35 = vld [vmem:[%s1 + $0x40] sm:$0xff]
  %v36 = vld [vmem:[%s1 + $0x48] sm:$0xff]
  %v37 = vld [vmem:[%s1 + $0x50] sm:$0xff]
  %v38 = vld [vmem:[%s1 + $0x58] sm:$0xff]
  %v39 = vld [vmem:[%s1 + $0x60] sm:$0xff]
  %v40 = vld [vmem:[%s1 + $0x68] sm:$0xff]
  %v41 = vld [vmem:[%s1 + $0x70] sm:$0xff]
  %v42 = vld [vmem:[%s1 + $0x78] sm:$0xff]
  %v43 = vld [vmem:[%s1 + $0x80] sm:$0xff]
  %v44 = vld [vmem:[%s1 + $0x88] sm:$0xff]
  %v45 = vld [vmem:[%s1 + $0x90] sm:$0xff]
  %v46 = vld [vmem:[%s1 + $0x98] sm:$0xff]
  %v47 = vld [vmem:[%s1 + $0xa0] sm:$0xff]
  %v48 = vld [vmem:[%s1 + $0xa8] sm:$0xff]
  %v49 = vld [vmem:[%s1 + $0xb0] sm:$0xff]
  %v50 = vld [vmem:[%s1 + $0xb8] sm:$0xff]
  %v51 = vld [vmem:[%s1 + $0xc0] sm:$0xff]
  %v52 = vld [vmem:[%s1 + $0xc8] sm:$0xff]
  %v53 = vld [vmem:[%s1 + $0xd0] sm:$0xff]
  %v54 = vld [vmem:[%s1 + $0xd8] sm:$0xff]
  %v55 = vld [vmem:[%s1 + $0xe0] sm:$0xff]
  %v56 = vld [vmem:[%s1 + $0xe8] sm:$0xff]
  %v57 = vld [vmem:[%s1 + $0xf0] sm:$0xff]
  %v58 = vld [vmem:[%s1 + $0xf8] sm:$0xff]
  %v59 = vld [vmem:[%s1 + $0x100] sm:$0xff]
  %v60 = vld [vmem:[%s1 + $0x108] sm:$0xff]
  %v61 = vld [vmem:[%s1 + $0x110] sm:$0xff]
  %v62 = vld [vmem:[%s1 + $0x118] sm:$0xff]
  %v63 = vld [vmem:[%s1 + $0x120] sm:$0xff]
  %v64 = vld [vmem:[%s1 + $0x128] sm:$0xff]
  %v65 = vld [vmem:[%s1 + $0x130] sm:$0xff]
  %v66 = vld [vmem:[%s1 + $0x138] sm:$0xff]
  %v67 = vld [vmem:[%s1 + $0x140] sm:$0xff]
  %v68 = vld [vmem:[%s1 + $0x148] sm:$0xff]
  %v69 = vld [vmem:[%s1 + $0x150] sm:$0xff]
  %v70 = vld [vmem:[%s1 + $0x158] sm:$0xff]
  %v71 = vld [vmem:[%s1 + $0x160] sm:$0xff]
  %v72 = vld [vmem:[%s1 + $0x168] sm:$0xff]
  %v73 = vld [vmem:[%s1 + $0x170] sm:$0xff]
  %v74 = vld [vmem:[%s1 + $0x178] sm:$0xff]
  %v75 = vld [vmem:[%s1 + $0x180] sm:$0xff]
  %v76 = vld [vmem:[%s1 + $0x188] sm:$0xff]
  %v77 = vld [vmem:[%s1 + $0x190] sm:$0xff]
  %v78 = vld [vmem:[%s1 + $0x198] sm:$0xff]
  %v79 = vld [vmem:[%s1 + $0x1a0] sm:$0xff]
  %v80 = vld [vmem:[%s1 + $0x1a8] sm:$0xff]
  %v81 = vld [vmem:[%s1 + $0x1b0] sm:$0xff]
  %v82 = vld [vmem:[%s1 + $0x1b8] sm:$0xff]
  %v83 = vld [vmem:[%s1 + $0x1c0] sm:$0xff]
  %v84 = vld [vmem:[%s1 + $0x1c8] sm:$0xff]
  %v85 = vld [vmem:[%s1 + $0x1d0] sm:$0xff]
  %v86 = vld [vmem:[%s1 + $0x1d8] sm:$0xff]
  %v87 = vld [vmem:[%s1 + $0x1e0] sm:$0xff]
  %v88 = vld [vmem:[%s1 + $0x1e8] sm:$0xff]
  %v89 = vld [vmem:[%s1 + $0x1f0] sm:$0xf]
  %v90 = vld [vmem:[%s2] sm:$0x1]
  %v92 = vperm.slane %v90, 0
  %vm94 = vcmask 949248
  %v96 = vsel %vm94, %v26, 0
  %vm98 = vcmask 1043456
  %v100 = vsel %vm98, %v89, 0
  %102 = vmatpush.msra.mxu0 %v42
  %103 = vmatpush.msra.mxu0 %v41
  %104 = vmatpush.msra.mxu0 %v40
  %105 = vmatpush.msra.mxu0 %v39
  %106 = vmatpush.msra.mxu0 %v38
  %107 = vmatpush.msra.mxu0 %v37
  %108 = vmatpush.msra.mxu0 %v36
  %109 = vmatpush.msra.mxu0 %v35
  %110 = vmatpush.msra.mxu0 %v34
  %111 = vmatpush.msra.mxu0 %v33
  %112 = vmatpush.msra.mxu0 %v32
  %113 = vmatpush.msra.mxu0 %v31
  %114 = vmatpush.msra.mxu0 %v30
  %115 = vmatpush.msra.mxu0 %v29
  %116 = vmatpush.msra.mxu0 %v28
  %117 = vmatpush.msra.mxu0 %v27
  %118 = vmatmul.f32.gmra.mxu0 %v23
  %v119 = vpop.f32.mrf.mxu0
  %v120 = vadd.f32 %v92, %v119
  %121 = vdwg.mxu0
  %122 = vmatpush.msra.mxu0 %v58
  %123 = vmatpush.msra.mxu0 %v57
  %124 = vmatpush.msra.mxu0 %v56
  %125 = vmatpush.msra.mxu0 %v55
  %126 = vmatpush.msra.mxu0 %v54
  %127 = vmatpush.msra.mxu0 %v53
  %128 = vmatpush.msra.mxu0 %v52
  %129 = vmatpush.msra.mxu0 %v51
  %130 = vmatpush.msra.mxu0 %v50
  %131 = vmatpush.msra.mxu0 %v49
  %132 = vmatpush.msra.mxu0 %v48
  %133 = vmatpush.msra.mxu0 %v47
  %134 = vmatpush.msra.mxu0 %v46
  %135 = vmatpush.msra.mxu0 %v45
  %136 = vmatpush.msra.mxu0 %v44
  %137 = vmatpush.msra.mxu0 %v43
  %138 = vmatmul.f32.gmra.mxu0 %v24
  %v139 = vpop.f32.mrf.mxu0
  %v140 = vadd.f32 %v120, %v139
  %141 = vdwg.mxu0
  %142 = vmatpush.msra.mxu0 %v74
  %143 = vmatpush.msra.mxu0 %v73
  %144 = vmatpush.msra.mxu0 %v72
  %145 = vmatpush.msra.mxu0 %v71
  %146 = vmatpush.msra.mxu0 %v70
  %147 = vmatpush.msra.mxu0 %v69
  %148 = vmatpush.msra.mxu0 %v68
  %149 = vmatpush.msra.mxu0 %v67
  %150 = vmatpush.msra.mxu0 %v66
  %151 = vmatpush.msra.mxu0 %v65
  %152 = vmatpush.msra.mxu0 %v64
  %153 = vmatpush.msra.mxu0 %v63
  %154 = vmatpush.msra.mxu0 %v62
  %155 = vmatpush.msra.mxu0 %v61
  %156 = vmatpush.msra.mxu0 %v60
  %157 = vmatpush.msra.mxu0 %v59
  %158 = vmatmul.f32.gmra.mxu0 %v25
  %v159 = vpop.f32.mrf.mxu0
  %v160 = vadd.f32 %v140, %v159
  %161 = vdwg.mxu0
  %162 = vmatpush.msra.mxu0 0.0
  %163 = vmatpush.msra.mxu0 %v100
  %164 = vmatpush.msra.mxu0 %v88
  %165 = vmatpush.msra.mxu0 %v87
  %166 = vmatpush.msra.mxu0 %v86
  %167 = vmatpush.msra.mxu0 %v85
  %168 = vmatpush.msra.mxu0 %v84
  %169 = vmatpush.msra.mxu0 %v83
  %170 = vmatpush.msra.mxu0 %v82
  %171 = vmatpush.msra.mxu0 %v81
  %172 = vmatpush.msra.mxu0 %v80
  %173 = vmatpush.msra.mxu0 %v79
  %174 = vmatpush.msra.mxu0 %v78
  %175 = vmatpush.msra.mxu0 %v77
  %176 = vmatpush.msra.mxu0 %v76
  %177 = vmatpush.msra.mxu0 %v75
  %178 = vmatmul.f32.gmra.mxu0 %v96
  %v179 = vpop.f32.mrf.mxu0
  %v180 = vadd.f32 %v160, %v179
  %181 = vdwg.mxu0
  %v182 = vmax.f32 %v180, 0.0
  %v183 = vld [vmem:[%s3] sm:$0xff]
  %v184 = vmul.f32 %v182, %v183
  %v185 = vld [vmem:[%s4] sm:$0xff]
  %v186 = vld [vmem:[%s4 + $0x8] sm:$0xff]
  %v187 = vld [vmem:[%s4 + $0x10] sm:$0xff]
  %v188 = vld [vmem:[%s4 + $0x18] sm:$0xff]
  %v189 = vld [vmem:[%s4 + $0x20] sm:$0xff]
  %v190 = vld [vmem:[%s4 + $0x28] sm:$0xff]
  %v191 = vld [vmem:[%s4 + $0x30] sm:$0xff]
  %v192 = vld [vmem:[%s4 + $0x38] sm:$0xff]
  %v193 = vld [vmem:[%s4 + $0x40] sm:$0xff]
  %v194 = vld [vmem:[%s4 + $0x48] sm:$0xff]
  %v195 = vld [vmem:[%s4 + $0x50] sm:$0xff]
  %v196 = vld [vmem:[%s4 + $0x58] sm:$0xff]
  %v197 = vld [vmem:[%s4 + $0x60] sm:$0xff]
  %v198 = vld [vmem:[%s4 + $0x68] sm:$0xff]
  %v199 = vld [vmem:[%s4 + $0x70] sm:$0xff]
  %v200 = vld [vmem:[%s4 + $0x78] sm:$0xff]
  %v201 = vld [vmem:[%s5] sm:$0x1]
  %v203 = vperm.slane %v201, 0
  %205 = vmatpush.msra.mxu0 %v200
  %206 = vmatpush.msra.mxu0 %v199
  %207 = vmatpush.msra.mxu0 %v198
  %208 = vmatpush.msra.mxu0 %v197
  %209 = vmatpush.msra.mxu0 %v196
  %210 = vmatpush.msra.mxu0 %v195
  %211 = vmatpush.msra.mxu0 %v194
  %212 = vmatpush.msra.mxu0 %v193
  %213 = vmatpush.msra.mxu0 %v192
  %214 = vmatpush.msra.mxu0 %v191
  %215 = vmatpush.msra.mxu0 %v190
  %216 = vmatpush.msra.mxu0 %v189
  %217 = vmatpush.msra.mxu0 %v188
  %218 = vmatpush.msra.mxu0 %v187
  %219 = vmatpush.msra.mxu0 %v186
  %220 = vmatpush.msra.mxu0 %v185
  %221 = vmatmul.f32.gmra.mxu0 %v184
  %v222 = vpop.f32.mrf.mxu0
  %v223 = vadd.f32 %v203, %v222
  %224 = vdwg.mxu0
  %vm225 = vcmask 80896
  %v226 = vsel %vm225, %v223, -inf
  %227 = vmax.xlane.f32.xlu0 %v226
  %v228 = vpop.xlane.xlu0 %227
  %v229 = vsub.f32 %v223, %v228
  %v230 = vmul.f32 %v229, 1.442695
  %v231 = vpow.pop %v230
  %v232 = vsel %vm225, %v231, 0.0
  %233 = vadd.xlane.f32.xlu0 %v232
  %v234 = vpop.xlane.xlu0 %233
  %v235 = vlog2.pop %v234
  %v236 = vmul.f32 %v235, 0.6931472
  %v237 = vsub.f32 %v229, %v236
  %238 = vst.msk [vmem:[%s6] sm:$0xff] %vm225, %v237
  // Predicated region
  $region26: #{net_forward.5} parent=0 // pred_check
    _
  $region27: #{net_forward.5} parent=0 // pred_check_branch
    %240 = sbr.rel (0) target = $region29
  $region28: #{net_forward.5} parent=0 // pred_region
    _
  $region29: #{net_forward.5} parent=0 // pred_fallthru
    _
  // Predicated region
  $region30: #{net_forward.5} parent=0 // pred_check
    _
  $region31: #{net_forward.5} parent=0 // pred_check_branch
    %242 = sbr.rel (0) target = $region33
  $region32: #{net_forward.5} parent=0 // pred_region
    _
  $region33: #{net_forward.5} parent=0 // pred_fallthru
    _

</llo_original>
